<compile_context>
chip_gen: v6e
topology: v6e:2x2x1
jax: 0.10.0
libtpu: 0.0.40
codegen_flags: <defaults>
</compile_context>

<pallas_src>
import math

import jax
import jax.numpy as jnp
import numpy as np
from jax import lax
from jax.experimental import pallas as pl
from jax.experimental.pallas import tpu as pltpu

_PI = math.pi
_PI_2 = math.pi / 2.0
_PI_4 = math.pi / 4.0
_TAN_3PI_8 = 2.414213562373095   # tan(3*pi/8)
_TAN_PI_8 = 0.4142135623730950   # tan(pi/8)


# ----------------------------------------------------------------------------
# In-kernel atan / atan2 (Cephes atanf style, float32, ~1e-6 abs error).
# Divides are kept exact (not pl.reciprocal(approx=True)) to stay safely
# inside the 1e-4 validation tolerance; the compiler already routes f32
# divides through the EUP reciprocal path.
# TODO(synk): switch to jnp.arctan2 once Mosaic guarantees a lax.atan2_p
# lowering.
# ----------------------------------------------------------------------------
def _atan_pos(ax):
    """arctan for non-negative float32 input via Cephes argument reduction."""
    big = ax > _TAN_3PI_8
    mid = jnp.logical_and(ax > _TAN_PI_8, jnp.logical_not(big))
    safe = jnp.where(ax == 0.0, 1.0, ax)
    z = jnp.where(big, -1.0 / safe, jnp.where(mid, (ax - 1.0) / (ax + 1.0), ax))
    y0 = jnp.where(big, _PI_2, jnp.where(mid, _PI_4, 0.0))
    z2 = z * z
    p = 8.05374449538e-2
    p = p * z2 - 1.38776856032e-1
    p = p * z2 + 1.99777106478e-1
    p = p * z2 - 3.33329491539e-1
    return y0 + p * z2 * z + z


def _atan(x):
    y = _atan_pos(jnp.abs(x))
    return jnp.where(x < 0.0, -y, y)


def _atan2(y, x):
    safe_x = jnp.where(x == 0.0, 1.0, x)
    base = _atan(y / safe_x)
    res_xneg = jnp.where(y >= 0.0, base + _PI, base - _PI)
    res_x0 = jnp.where(y > 0.0, _PI_2, jnp.where(y < 0.0, -_PI_2, 0.0))
    return jnp.where(x > 0.0, base, jnp.where(x < 0.0, res_xneg, res_x0))


# ----------------------------------------------------------------------------
# Pallas kernel: one (batch, point-tile) per grid step.
#   xyz_full_ref : (3, N)       f32  -- whole cloud (gather source + global vol)
#   xyz_tile_ref : (3, TILE_N)  f32  -- centre points of this tile
#   idx_ref      : (K, TILE_N)  i32  -- neighbour indices (N on lanes)
#   rep_ref      : (9, K, TILE_N) f32
#   dis_ref      : (K, TILE_N)    f32
#   ratio_ref    : (1, TILE_N)    f32
# ----------------------------------------------------------------------------
def lpr_kernel(xyz_full_ref, xyz_tile_ref, idx_ref, rep_ref, dis_ref, ratio_ref):
    k, tile_n = idx_ref.shape
    n = xyz_full_ref.shape[1]

    xyz_full = xyz_full_ref[...]                      # (3, N)
    ctr = xyz_tile_ref[...]                           # (3, TILE_N)
    idx = idx_ref[...]                                # (K, TILE_N)

    # ---- gather_neighbour: transposed one-hot matmul, chunked per slot k ----
    # nbr_c[kk, t] = xyz_full[c, idx[kk, t]]
    iota_n = lax.broadcasted_iota(jnp.int32, (n, tile_n), 0)
    gx, gy, gz = [], [], []
    for kk in range(k):                               # K is small & static
        onehot = (idx[kk:kk + 1, :] == iota_n).astype(jnp.float32)      # (N, T)
        g = jnp.dot(xyz_full, onehot, preferred_element_type=jnp.float32)  # (3, T)
        gx.append(g[0:1, :])
        gy.append(g[1:2, :])
        gz.append(g[2:3, :])
    nbr_x = jnp.concatenate(gx, axis=0)               # (K, TILE_N)
    nbr_y = jnp.concatenate(gy, axis=0)
    nbr_z = jnp.concatenate(gz, axis=0)

    # ---- relative_pos_transforming (all on dense (K, TILE_N) planes) -------
    cx = ctr[0:1, :]                                  # (1, TILE_N)
    cy = ctr[1:2, :]
    cz = ctr[2:3, :]
    rx = cx - nbr_x                                   # (K, TILE_N)
    ry = cy - nbr_y
    rz = cz - nbr_z

    xx = rx * rx
    yy = ry * ry
    zz = rz * rz
    rel_alpha = _atan2(ry, rx)                        # (K, TILE_N)
    rel_xydis = jnp.sqrt(xx + yy)
    rel_beta = _atan2(rz, rel_xydis)
    rel_dis = jnp.sqrt(xx + yy + zz)                  # (K, TILE_N)
    exp_dis = jnp.exp(-rel_dis)
    local_volume = jnp.max(rel_dis, axis=0, keepdims=True) ** 3   # (1, TILE_N)

    # ---- direction = point - mean(neighbours) -------------------------------
    inv_k = 1.0 / k
    dx = cx - jnp.sum(nbr_x, axis=0, keepdims=True) * inv_k       # (1, TILE_N)
    dy = cy - jnp.sum(nbr_y, axis=0, keepdims=True) * inv_k
    dz = cz - jnp.sum(nbr_z, axis=0, keepdims=True) * inv_k
    dir_alpha = _atan2(dy, dx)                        # (1, TILE_N)
    dir_xydis = jnp.sqrt(dx * dx + dy * dy)
    dir_beta = _atan2(dz, dir_xydis)

    angle_alpha = rel_alpha - dir_alpha               # (K, TILE_N)
    angle_beta = rel_beta - dir_beta

    # ---- global / local volume ratio (from the resident full cloud) --------
    gdis = jnp.sqrt(xyz_full[0:1, :] ** 2
                    + xyz_full[1:2, :] ** 2
                    + xyz_full[2:3, :] ** 2)          # (1, N)
    gvol = jnp.max(gdis, axis=1, keepdims=True) ** 3  # (1, 1)
    ratio = local_volume / gvol                       # (1, TILE_N)

    # ---- lane-dense stores ---------------------------------------------------
    # channel order: [angle_alpha, angle_beta, rel_dis, xyz_tile(3), nbr(3)]
    rep_ref[0] = angle_alpha
    rep_ref[1] = angle_beta
    rep_ref[2] = rel_dis
    rep_ref[3] = jnp.broadcast_to(cx, (k, tile_n))
    rep_ref[4] = jnp.broadcast_to(cy, (k, tile_n))
    rep_ref[5] = jnp.broadcast_to(cz, (k, tile_n))
    rep_ref[6] = nbr_x
    rep_ref[7] = nbr_y
    rep_ref[8] = nbr_z
    dis_ref[...] = exp_dis
    ratio_ref[...] = ratio


def _pick_tile_n(n):
    if n <= 512:
        return n                                      # single full-width tile
    for t in (512, 256, 128):                         # lane-aligned tiles
        if n % t == 0:
            return t
    return n


def lpr_forward(xyz, neigh_idx, *, tile_n=None):
    """Pallas implementation of LPR.forward.

    xyz       : (B, N, 3) float
    neigh_idx : (B, N, K) int
    returns (local_rep (B,N,K,9), geometric_dis (B,N,K,1), lg_volume_ratio (B,N,1))
    """
    b, n, _ = xyz.shape
    k = neigh_idx.shape[-1]
    if tile_n is None:
        tile_n = _pick_tile_n(n)
    assert n % tile_n == 0, "point-tile size must divide N"
    nt = n // tile_n

    # Lane-dense kernel layouts: N on lanes everywhere.
    xyz_t = jnp.transpose(xyz.astype(jnp.float32), (0, 2, 1))        # (B, 3, N)
    idx_t = jnp.transpose(neigh_idx.astype(jnp.int32), (0, 2, 1))    # (B, K, N)

    out_shape = (
        jax.ShapeDtypeStruct((b, 9, k, n), jnp.float32),   # local_rep planes
        jax.ShapeDtypeStruct((b, k, n), jnp.float32),      # exp(-relative_dis)
        jax.ShapeDtypeStruct((b, 1, n), jnp.float32),      # lg_volume_ratio
    )
    rep_t, dis_t, ratio_t = pl.pallas_call(
        lpr_kernel,
        out_shape=out_shape,
        grid=(b, nt),
        in_specs=[
            pl.BlockSpec((None, 3, n), lambda bi, ti: (bi, 0, 0)),        # full xyz
            pl.BlockSpec((None, 3, tile_n), lambda bi, ti: (bi, 0, ti)),  # centres
            pl.BlockSpec((None, k, tile_n), lambda bi, ti: (bi, 0, ti)),  # idx tile
        ],
        out_specs=(
            pl.BlockSpec((None, 9, k, tile_n), lambda bi, ti: (bi, 0, 0, ti)),
            pl.BlockSpec((None, k, tile_n), lambda bi, ti: (bi, 0, ti)),
            pl.BlockSpec((None, 1, tile_n), lambda bi, ti: (bi, 0, ti)),
        ),
        compiler_params=pltpu.CompilerParams(
            dimension_semantics=("parallel", "parallel")),   # v7x: 2 TCs
    )(xyz_t, xyz_t, idx_t)

    # Back to the PyTorch module's output layout (wrapper-side layout plumbing).
    local_rep = jnp.transpose(rep_t, (0, 3, 2, 1))                   # (B, N, K, 9)
    geometric_dis = jnp.transpose(dis_t, (0, 2, 1))[..., None]       # (B, N, K, 1)
    lg_volume_ratio = jnp.transpose(ratio_t, (0, 2, 1))              # (B, N, 1)
    return local_rep, geometric_dis, lg_volume_ratio


# ----------------------------------------------------------------------------
# Pure-JAX reference (mirrors the PyTorch module) for correctness checking.
# ----------------------------------------------------------------------------
def lpr_reference(xyz, neigh_idx):
    nbr = jax.vmap(lambda pts, idx: pts[idx])(xyz, neigh_idx)        # (B,N,K,3)
    xyz_tile = jnp.broadcast_to(xyz[:, :, None, :], nbr.shape)
    rel = xyz_tile - nbr
    rel_alpha = jnp.arctan2(rel[..., 1], rel[..., 0])[..., None]
    rel_xydis = jnp.sqrt(jnp.sum(rel[..., :2] ** 2, axis=-1))
    rel_beta = jnp.arctan2(rel[..., 2], rel_xydis)[..., None]
    rel_dis = jnp.sqrt(jnp.sum(rel ** 2, axis=-1, keepdims=True))
    rel_info = jnp.concatenate([rel_dis, xyz_tile, nbr], axis=-1)
    exp_dis = jnp.exp(-rel_dis)
    local_volume = jnp.max(jnp.max(rel_dis, axis=3), axis=2) ** 3    # (B,N)

    nmean = jnp.mean(nbr, axis=2)
    direction = xyz - nmean
    dir_tile = jnp.broadcast_to(direction[:, :, None, :], nbr.shape)
    dir_alpha = jnp.arctan2(dir_tile[..., 1], dir_tile[..., 0])[..., None]
    dir_xydis = jnp.sqrt(jnp.sum(dir_tile[..., :2] ** 2, axis=-1))
    dir_beta = jnp.arctan2(dir_tile[..., 2], dir_xydis)[..., None]
    angle = jnp.concatenate([rel_alpha - dir_alpha, rel_beta - dir_beta], axis=-1)
    local_rep = jnp.concatenate([angle, rel_info], axis=-1)

    gdis = jnp.sqrt(jnp.sum(xyz ** 2, axis=2))
    gvol = jnp.max(gdis, axis=1) ** 3
    ratio = (local_volume / gvol[:, None])[..., None]
    return local_rep, exp_dis, ratio


if __name__ == "__main__":
    B, N, K = 2, 16, 8
    key = jax.random.PRNGKey(0)
    kx, ki = jax.random.split(key)
    xyz = jax.random.normal(kx, (B, N, 3), dtype=jnp.float32)
    neigh_idx = jax.random.randint(ki, (B, N, K), 0, N, dtype=jnp.int32)

    outs = lpr_forward(xyz, neigh_idx)
    outs = jax.block_until_ready(outs)

    refs = lpr_reference(xyz, neigh_idx)
    for got, want in zip(outs, refs):
        np.testing.assert_allclose(np.asarray(got), np.asarray(want),
                                   rtol=1e-4, atol=1e-4)
    print("KERNEL_OK")
</pallas_src>

<mosaic_0001>
module attributes {stable_mosaic.version = 11 : i64} {
  func.func @lpr_kernel(%arg0: i32, %arg1: i32, %arg2: memref<1x3x16xf32, #tpu.memory_space<vmem>>, %arg3: memref<1x3x16xf32, #tpu.memory_space<vmem>>, %arg4: memref<1x8x16xi32, #tpu.memory_space<vmem>>, %arg5: memref<1x9x8x16xf32, #tpu.memory_space<vmem>>, %arg6: memref<1x8x16xf32, #tpu.memory_space<vmem>>, %arg7: memref<1x1x16xf32, #tpu.memory_space<vmem>>) attributes {dimension_semantics = [#tpu.dimension_semantics<parallel>, #tpu.dimension_semantics<parallel>], iteration_bounds = array<i64: 2, 1>, scalar_prefetch = 0 : i64, scratch_operands = 0 : i64, tpu.core_type = #tpu.core_type<tc>, window_params = [{transform_indices = @transform_0, window_bounds = array<i64: 1, 3, 16>}, {transform_indices = @transform_1, window_bounds = array<i64: 1, 3, 16>}, {transform_indices = @transform_2, window_bounds = array<i64: 1, 8, 16>}, {transform_indices = @transform_3, window_bounds = array<i64: 1, 9, 8, 16>}, {transform_indices = @transform_4, window_bounds = array<i64: 1, 8, 16>}, {transform_indices = @transform_5, window_bounds = array<i64: 1, 1, 16>}]} {
    %c0 = arith.constant 0 : index
    %c0_0 = arith.constant 0 : index
    %c0_1 = arith.constant 0 : index
    %0 = vector.load %arg2[%c0, %c0_0, %c0_1] : memref<1x3x16xf32, #tpu.memory_space<vmem>>, vector<1x3x16xf32>
    %1 = vector.shape_cast %0 : vector<1x3x16xf32> to vector<3x16xf32>
    %c0_2 = arith.constant 0 : index
    %c0_3 = arith.constant 0 : index
    %c0_4 = arith.constant 0 : index
    %2 = vector.load %arg3[%c0_2, %c0_3, %c0_4] : memref<1x3x16xf32, #tpu.memory_space<vmem>>, vector<1x3x16xf32>
    %3 = vector.shape_cast %2 : vector<1x3x16xf32> to vector<3x16xf32>
    %c0_5 = arith.constant 0 : index
    %c0_6 = arith.constant 0 : index
    %c0_7 = arith.constant 0 : index
    %4 = vector.load %arg4[%c0_5, %c0_6, %c0_7] : memref<1x8x16xi32, #tpu.memory_space<vmem>>, vector<1x8x16xi32>
    %5 = vector.shape_cast %4 : vector<1x8x16xi32> to vector<8x16xi32>
    %6 = tpu.iota {dimensions = array<i32: 0>} : vector<16x16xi32>
    %7 = vector.extract_strided_slice %5 {offsets = [0, 0], sizes = [1, 16], strides = [1, 1]} : vector<8x16xi32> to vector<1x16xi32>
    %8 = vector.broadcast %7 : vector<1x16xi32> to vector<16x16xi32>
    %9 = arith.cmpi eq, %8, %6 : vector<16x16xi32>
    %10 = arith.extui %9 : vector<16x16xi1> to vector<16x16xi32>
    %11 = arith.sitofp %10 : vector<16x16xi32> to vector<16x16xf32>
    %cst = arith.constant dense<0.000000e+00> : vector<3x16xf32>
    %12 = tpu.matmul %1, %11, %cst {dimension_numbers = #tpu.dot_dimension_numbers<[1], [0], [0], [1], [0, 0, 1, 1], [], []>} : vector<3x16xf32>, vector<16x16xf32>, vector<3x16xf32> -> vector<3x16xf32>
    %13 = vector.extract_strided_slice %12 {offsets = [0, 0], sizes = [1, 16], strides = [1, 1]} : vector<3x16xf32> to vector<1x16xf32>
    %14 = vector.extract_strided_slice %12 {offsets = [1, 0], sizes = [1, 16], strides = [1, 1]} : vector<3x16xf32> to vector<1x16xf32>
    %15 = vector.extract_strided_slice %12 {offsets = [2, 0], sizes = [1, 16], strides = [1, 1]} : vector<3x16xf32> to vector<1x16xf32>
    %16 = vector.extract_strided_slice %5 {offsets = [1, 0], sizes = [1, 16], strides = [1, 1]} : vector<8x16xi32> to vector<1x16xi32>
    %17 = vector.broadcast %16 : vector<1x16xi32> to vector<16x16xi32>
    %18 = arith.cmpi eq, %17, %6 : vector<16x16xi32>
    %19 = arith.extui %18 : vector<16x16xi1> to vector<16x16xi32>
    %20 = arith.sitofp %19 : vector<16x16xi32> to vector<16x16xf32>
    %cst_8 = arith.constant dense<0.000000e+00> : vector<3x16xf32>
    %21 = tpu.matmul %1, %20, %cst_8 {dimension_numbers = #tpu.dot_dimension_numbers<[1], [0], [0], [1], [0, 0, 1, 1], [], []>} : vector<3x16xf32>, vector<16x16xf32>, vector<3x16xf32> -> vector<3x16xf32>
    %22 = vector.extract_strided_slice %21 {offsets = [0, 0], sizes = [1, 16], strides = [1, 1]} : vector<3x16xf32> to vector<1x16xf32>
    %23 = vector.extract_strided_slice %21 {offsets = [1, 0], sizes = [1, 16], strides = [1, 1]} : vector<3x16xf32> to vector<1x16xf32>
    %24 = vector.extract_strided_slice %21 {offsets = [2, 0], sizes = [1, 16], strides = [1, 1]} : vector<3x16xf32> to vector<1x16xf32>
    %25 = vector.extract_strided_slice %5 {offsets = [2, 0], sizes = [1, 16], strides = [1, 1]} : vector<8x16xi32> to vector<1x16xi32>
    %26 = vector.broadcast %25 : vector<1x16xi32> to vector<16x16xi32>
    %27 = arith.cmpi eq, %26, %6 : vector<16x16xi32>
    %28 = arith.extui %27 : vector<16x16xi1> to vector<16x16xi32>
    %29 = arith.sitofp %28 : vector<16x16xi32> to vector<16x16xf32>
    %cst_9 = arith.constant dense<0.000000e+00> : vector<3x16xf32>
    %30 = tpu.matmul %1, %29, %cst_9 {dimension_numbers = #tpu.dot_dimension_numbers<[1], [0], [0], [1], [0, 0, 1, 1], [], []>} : vector<3x16xf32>, vector<16x16xf32>, vector<3x16xf32> -> vector<3x16xf32>
    %31 = vector.extract_strided_slice %30 {offsets = [0, 0], sizes = [1, 16], strides = [1, 1]} : vector<3x16xf32> to vector<1x16xf32>
    %32 = vector.extract_strided_slice %30 {offsets = [1, 0], sizes = [1, 16], strides = [1, 1]} : vector<3x16xf32> to vector<1x16xf32>
    %33 = vector.extract_strided_slice %30 {offsets = [2, 0], sizes = [1, 16], strides = [1, 1]} : vector<3x16xf32> to vector<1x16xf32>
    %34 = vector.extract_strided_slice %5 {offsets = [3, 0], sizes = [1, 16], strides = [1, 1]} : vector<8x16xi32> to vector<1x16xi32>
    %35 = vector.broadcast %34 : vector<1x16xi32> to vector<16x16xi32>
    %36 = arith.cmpi eq, %35, %6 : vector<16x16xi32>
    %37 = arith.extui %36 : vector<16x16xi1> to vector<16x16xi32>
    %38 = arith.sitofp %37 : vector<16x16xi32> to vector<16x16xf32>
    %cst_10 = arith.constant dense<0.000000e+00> : vector<3x16xf32>
    %39 = tpu.matmul %1, %38, %cst_10 {dimension_numbers = #tpu.dot_dimension_numbers<[1], [0], [0], [1], [0, 0, 1, 1], [], []>} : vector<3x16xf32>, vector<16x16xf32>, vector<3x16xf32> -> vector<3x16xf32>
    %40 = vector.extract_strided_slice %39 {offsets = [0, 0], sizes = [1, 16], strides = [1, 1]} : vector<3x16xf32> to vector<1x16xf32>
    %41 = vector.extract_strided_slice %39 {offsets = [1, 0], sizes = [1, 16], strides = [1, 1]} : vector<3x16xf32> to vector<1x16xf32>
    %42 = vector.extract_strided_slice %39 {offsets = [2, 0], sizes = [1, 16], strides = [1, 1]} : vector<3x16xf32> to vector<1x16xf32>
    %43 = vector.extract_strided_slice %5 {offsets = [4, 0], sizes = [1, 16], strides = [1, 1]} : vector<8x16xi32> to vector<1x16xi32>
    %44 = vector.broadcast %43 : vector<1x16xi32> to vector<16x16xi32>
    %45 = arith.cmpi eq, %44, %6 : vector<16x16xi32>
    %46 = arith.extui %45 : vector<16x16xi1> to vector<16x16xi32>
    %47 = arith.sitofp %46 : vector<16x16xi32> to vector<16x16xf32>
    %cst_11 = arith.constant dense<0.000000e+00> : vector<3x16xf32>
    %48 = tpu.matmul %1, %47, %cst_11 {dimension_numbers = #tpu.dot_dimension_numbers<[1], [0], [0], [1], [0, 0, 1, 1], [], []>} : vector<3x16xf32>, vector<16x16xf32>, vector<3x16xf32> -> vector<3x16xf32>
    %49 = vector.extract_strided_slice %48 {offsets = [0, 0], sizes = [1, 16], strides = [1, 1]} : vector<3x16xf32> to vector<1x16xf32>
    %50 = vector.extract_strided_slice %48 {offsets = [1, 0], sizes = [1, 16], strides = [1, 1]} : vector<3x16xf32> to vector<1x16xf32>
    %51 = vector.extract_strided_slice %48 {offsets = [2, 0], sizes = [1, 16], strides = [1, 1]} : vector<3x16xf32> to vector<1x16xf32>
    %52 = vector.extract_strided_slice %5 {offsets = [5, 0], sizes = [1, 16], strides = [1, 1]} : vector<8x16xi32> to vector<1x16xi32>
    %53 = vector.broadcast %52 : vector<1x16xi32> to vector<16x16xi32>
    %54 = arith.cmpi eq, %53, %6 : vector<16x16xi32>
    %55 = arith.extui %54 : vector<16x16xi1> to vector<16x16xi32>
    %56 = arith.sitofp %55 : vector<16x16xi32> to vector<16x16xf32>
    %cst_12 = arith.constant dense<0.000000e+00> : vector<3x16xf32>
    %57 = tpu.matmul %1, %56, %cst_12 {dimension_numbers = #tpu.dot_dimension_numbers<[1], [0], [0], [1], [0, 0, 1, 1], [], []>} : vector<3x16xf32>, vector<16x16xf32>, vector<3x16xf32> -> vector<3x16xf32>
    %58 = vector.extract_strided_slice %57 {offsets = [0, 0], sizes = [1, 16], strides = [1, 1]} : vector<3x16xf32> to vector<1x16xf32>
    %59 = vector.extract_strided_slice %57 {offsets = [1, 0], sizes = [1, 16], strides = [1, 1]} : vector<3x16xf32> to vector<1x16xf32>
    %60 = vector.extract_strided_slice %57 {offsets = [2, 0], sizes = [1, 16], strides = [1, 1]} : vector<3x16xf32> to vector<1x16xf32>
    %61 = vector.extract_strided_slice %5 {offsets = [6, 0], sizes = [1, 16], strides = [1, 1]} : vector<8x16xi32> to vector<1x16xi32>
    %62 = vector.broadcast %61 : vector<1x16xi32> to vector<16x16xi32>
    %63 = arith.cmpi eq, %62, %6 : vector<16x16xi32>
    %64 = arith.extui %63 : vector<16x16xi1> to vector<16x16xi32>
    %65 = arith.sitofp %64 : vector<16x16xi32> to vector<16x16xf32>
    %cst_13 = arith.constant dense<0.000000e+00> : vector<3x16xf32>
    %66 = tpu.matmul %1, %65, %cst_13 {dimension_numbers = #tpu.dot_dimension_numbers<[1], [0], [0], [1], [0, 0, 1, 1], [], []>} : vector<3x16xf32>, vector<16x16xf32>, vector<3x16xf32> -> vector<3x16xf32>
    %67 = vector.extract_strided_slice %66 {offsets = [0, 0], sizes = [1, 16], strides = [1, 1]} : vector<3x16xf32> to vector<1x16xf32>
    %68 = vector.extract_strided_slice %66 {offsets = [1, 0], sizes = [1, 16], strides = [1, 1]} : vector<3x16xf32> to vector<1x16xf32>
    %69 = vector.extract_strided_slice %66 {offsets = [2, 0], sizes = [1, 16], strides = [1, 1]} : vector<3x16xf32> to vector<1x16xf32>
    %70 = vector.extract_strided_slice %5 {offsets = [7, 0], sizes = [1, 16], strides = [1, 1]} : vector<8x16xi32> to vector<1x16xi32>
    %71 = vector.broadcast %70 : vector<1x16xi32> to vector<16x16xi32>
    %72 = arith.cmpi eq, %71, %6 : vector<16x16xi32>
    %73 = arith.extui %72 : vector<16x16xi1> to vector<16x16xi32>
    %74 = arith.sitofp %73 : vector<16x16xi32> to vector<16x16xf32>
    %cst_14 = arith.constant dense<0.000000e+00> : vector<3x16xf32>
    %75 = tpu.matmul %1, %74, %cst_14 {dimension_numbers = #tpu.dot_dimension_numbers<[1], [0], [0], [1], [0, 0, 1, 1], [], []>} : vector<3x16xf32>, vector<16x16xf32>, vector<3x16xf32> -> vector<3x16xf32>
    %76 = vector.extract_strided_slice %75 {offsets = [0, 0], sizes = [1, 16], strides = [1, 1]} : vector<3x16xf32> to vector<1x16xf32>
    %77 = vector.extract_strided_slice %75 {offsets = [1, 0], sizes = [1, 16], strides = [1, 1]} : vector<3x16xf32> to vector<1x16xf32>
    %78 = vector.extract_strided_slice %75 {offsets = [2, 0], sizes = [1, 16], strides = [1, 1]} : vector<3x16xf32> to vector<1x16xf32>
    %79 = tpu.concatenate %13, %22, %31, %40, %49, %58, %67, %76 in 0 : vector<1x16xf32>, vector<1x16xf32>, vector<1x16xf32>, vector<1x16xf32>, vector<1x16xf32>, vector<1x16xf32>, vector<1x16xf32>, vector<1x16xf32> -> vector<8x16xf32>
    %80 = tpu.concatenate %14, %23, %32, %41, %50, %59, %68, %77 in 0 : vector<1x16xf32>, vector<1x16xf32>, vector<1x16xf32>, vector<1x16xf32>, vector<1x16xf32>, vector<1x16xf32>, vector<1x16xf32>, vector<1x16xf32> -> vector<8x16xf32>
    %81 = tpu.concatenate %15, %24, %33, %42, %51, %60, %69, %78 in 0 : vector<1x16xf32>, vector<1x16xf32>, vector<1x16xf32>, vector<1x16xf32>, vector<1x16xf32>, vector<1x16xf32>, vector<1x16xf32>, vector<1x16xf32> -> vector<8x16xf32>
    %82 = vector.extract_strided_slice %3 {offsets = [0, 0], sizes = [1, 16], strides = [1, 1]} : vector<3x16xf32> to vector<1x16xf32>
    %83 = vector.extract_strided_slice %3 {offsets = [1, 0], sizes = [1, 16], strides = [1, 1]} : vector<3x16xf32> to vector<1x16xf32>
    %84 = vector.extract_strided_slice %3 {offsets = [2, 0], sizes = [1, 16], strides = [1, 1]} : vector<3x16xf32> to vector<1x16xf32>
    %85 = vector.broadcast %82 : vector<1x16xf32> to vector<8x16xf32>
    %86 = arith.subf %85, %79 : vector<8x16xf32>
    %87 = vector.broadcast %83 : vector<1x16xf32> to vector<8x16xf32>
    %88 = arith.subf %87, %80 : vector<8x16xf32>
    %89 = vector.broadcast %84 : vector<1x16xf32> to vector<8x16xf32>
    %90 = arith.subf %89, %81 : vector<8x16xf32>
    %91 = arith.mulf %86, %86 : vector<8x16xf32>
    %92 = arith.mulf %88, %88 : vector<8x16xf32>
    %93 = arith.mulf %90, %90 : vector<8x16xf32>
    %cst_15 = arith.constant 0.000000e+00 : f32
    %94 = vector.broadcast %cst_15 : f32 to vector<8x16xf32>
    %95 = arith.cmpf oeq, %86, %94 : vector<8x16xf32>
    %cst_16 = arith.constant 1.000000e+00 : f32
    %96 = vector.broadcast %cst_16 : f32 to vector<8x16xf32>
    %97 = arith.select %95, %96, %86 : vector<8x16xi1>, vector<8x16xf32>
    %98 = arith.divf %88, %97 : vector<8x16xf32>
    %99 = math.absf %98 : vector<8x16xf32>
    %cst_17 = arith.constant 2.41421366 : f32
    %100 = vector.broadcast %cst_17 : f32 to vector<8x16xf32>
    %101 = arith.cmpf ogt, %99, %100 : vector<8x16xf32>
    %cst_18 = arith.constant 0.414213568 : f32
    %102 = vector.broadcast %cst_18 : f32 to vector<8x16xf32>
    %103 = arith.cmpf ogt, %99, %102 : vector<8x16xf32>
    %cst_19 = arith.constant dense<true> : vector<8x16xi1>
    %104 = arith.xori %101, %cst_19 : vector<8x16xi1>
    %105 = arith.andi %103, %104 : vector<8x16xi1>
    %cst_20 = arith.constant 0.000000e+00 : f32
    %106 = vector.broadcast %cst_20 : f32 to vector<8x16xf32>
    %107 = arith.cmpf oeq, %99, %106 : vector<8x16xf32>
    %cst_21 = arith.constant 1.000000e+00 : f32
    %108 = vector.broadcast %cst_21 : f32 to vector<8x16xf32>
    %109 = arith.select %107, %108, %99 : vector<8x16xi1>, vector<8x16xf32>
    %cst_22 = arith.constant -1.000000e+00 : f32
    %110 = vector.broadcast %cst_22 : f32 to vector<8x16xf32>
    %111 = arith.divf %110, %109 : vector<8x16xf32>
    %cst_23 = arith.constant 1.000000e+00 : f32
    %112 = vector.broadcast %cst_23 : f32 to vector<8x16xf32>
    %113 = arith.subf %99, %112 : vector<8x16xf32>
    %cst_24 = arith.constant 1.000000e+00 : f32
    %114 = vector.broadcast %cst_24 : f32 to vector<8x16xf32>
    %115 = arith.addf %99, %114 : vector<8x16xf32>
    %116 = arith.divf %113, %115 : vector<8x16xf32>
    %117 = arith.select %105, %116, %99 : vector<8x16xi1>, vector<8x16xf32>
    %118 = arith.select %101, %111, %117 : vector<8x16xi1>, vector<8x16xf32>
    %cst_25 = arith.constant 0.785398185 : f32
    %cst_26 = arith.constant 0.000000e+00 : f32
    %119 = vector.broadcast %cst_25 : f32 to vector<8x16xf32>
    %120 = vector.broadcast %cst_26 : f32 to vector<8x16xf32>
    %121 = arith.select %105, %119, %120 : vector<8x16xi1>, vector<8x16xf32>
    %cst_27 = arith.constant 1.57079637 : f32
    %122 = vector.broadcast %cst_27 : f32 to vector<8x16xf32>
    %123 = arith.select %101, %122, %121 : vector<8x16xi1>, vector<8x16xf32>
    %124 = arith.mulf %118, %118 : vector<8x16xf32>
    %cst_28 = arith.constant 0.0805374458 : f32
    %125 = vector.broadcast %cst_28 : f32 to vector<8x16xf32>
    %126 = arith.mulf %125, %124 : vector<8x16xf32>
    %cst_29 = arith.constant 0.138776854 : f32
    %127 = vector.broadcast %cst_29 : f32 to vector<8x16xf32>
    %128 = arith.subf %126, %127 : vector<8x16xf32>
    %129 = arith.mulf %128, %124 : vector<8x16xf32>
    %cst_30 = arith.constant 0.199777111 : f32
    %130 = vector.broadcast %cst_30 : f32 to vector<8x16xf32>
    %131 = arith.addf %129, %130 : vector<8x16xf32>
    %132 = arith.mulf %131, %124 : vector<8x16xf32>
    %cst_31 = arith.constant 0.333329499 : f32
    %133 = vector.broadcast %cst_31 : f32 to vector<8x16xf32>
    %134 = arith.subf %132, %133 : vector<8x16xf32>
    %135 = arith.mulf %134, %124 : vector<8x16xf32>
    %136 = arith.mulf %135, %118 : vector<8x16xf32>
    %137 = arith.addf %123, %136 : vector<8x16xf32>
    %138 = arith.addf %137, %118 : vector<8x16xf32>
    %cst_32 = arith.constant 0.000000e+00 : f32
    %139 = vector.broadcast %cst_32 : f32 to vector<8x16xf32>
    %140 = arith.cmpf olt, %98, %139 : vector<8x16xf32>
    %cst_33 = arith.constant 0.000000e+00 : f32
    %141 = vector.broadcast %cst_33 : f32 to vector<8x16xf32>
    %142 = arith.subf %141, %138 : vector<8x16xf32>
    %143 = arith.select %140, %142, %138 : vector<8x16xi1>, vector<8x16xf32>
    %cst_34 = arith.constant 0.000000e+00 : f32
    %144 = vector.broadcast %cst_34 : f32 to vector<8x16xf32>
    %145 = arith.cmpf oge, %88, %144 : vector<8x16xf32>
    %cst_35 = arith.constant 3.14159274 : f32
    %146 = vector.broadcast %cst_35 : f32 to vector<8x16xf32>
    %147 = arith.addf %143, %146 : vector<8x16xf32>
    %cst_36 = arith.constant 3.14159274 : f32
    %148 = vector.broadcast %cst_36 : f32 to vector<8x16xf32>
    %149 = arith.subf %143, %148 : vector<8x16xf32>
    %150 = arith.select %145, %147, %149 : vector<8x16xi1>, vector<8x16xf32>
    %cst_37 = arith.constant 0.000000e+00 : f32
    %151 = vector.broadcast %cst_37 : f32 to vector<8x16xf32>
    %152 = arith.cmpf ogt, %88, %151 : vector<8x16xf32>
    %cst_38 = arith.constant 0.000000e+00 : f32
    %153 = vector.broadcast %cst_38 : f32 to vector<8x16xf32>
    %154 = arith.cmpf olt, %88, %153 : vector<8x16xf32>
    %cst_39 = arith.constant -1.57079637 : f32
    %cst_40 = arith.constant 0.000000e+00 : f32
    %155 = vector.broadcast %cst_39 : f32 to vector<8x16xf32>
    %156 = vector.broadcast %cst_40 : f32 to vector<8x16xf32>
    %157 = arith.select %154, %155, %156 : vector<8x16xi1>, vector<8x16xf32>
    %cst_41 = arith.constant 1.57079637 : f32
    %158 = vector.broadcast %cst_41 : f32 to vector<8x16xf32>
    %159 = arith.select %152, %158, %157 : vector<8x16xi1>, vector<8x16xf32>
    %cst_42 = arith.constant 0.000000e+00 : f32
    %160 = vector.broadcast %cst_42 : f32 to vector<8x16xf32>
    %161 = arith.cmpf ogt, %86, %160 : vector<8x16xf32>
    %cst_43 = arith.constant 0.000000e+00 : f32
    %162 = vector.broadcast %cst_43 : f32 to vector<8x16xf32>
    %163 = arith.cmpf olt, %86, %162 : vector<8x16xf32>
    %164 = arith.select %163, %150, %159 : vector<8x16xi1>, vector<8x16xf32>
    %165 = arith.select %161, %143, %164 : vector<8x16xi1>, vector<8x16xf32>
    %166 = arith.addf %91, %92 : vector<8x16xf32>
    %167 = math.sqrt %166 : vector<8x16xf32>
    %cst_44 = arith.constant 0.000000e+00 : f32
    %168 = vector.broadcast %cst_44 : f32 to vector<8x16xf32>
    %169 = arith.cmpf oeq, %167, %168 : vector<8x16xf32>
    %cst_45 = arith.constant 1.000000e+00 : f32
    %170 = vector.broadcast %cst_45 : f32 to vector<8x16xf32>
    %171 = arith.select %169, %170, %167 : vector<8x16xi1>, vector<8x16xf32>
    %172 = arith.divf %90, %171 : vector<8x16xf32>
    %173 = math.absf %172 : vector<8x16xf32>
    %cst_46 = arith.constant 2.41421366 : f32
    %174 = vector.broadcast %cst_46 : f32 to vector<8x16xf32>
    %175 = arith.cmpf ogt, %173, %174 : vector<8x16xf32>
    %cst_47 = arith.constant 0.414213568 : f32
    %176 = vector.broadcast %cst_47 : f32 to vector<8x16xf32>
    %177 = arith.cmpf ogt, %173, %176 : vector<8x16xf32>
    %cst_48 = arith.constant dense<true> : vector<8x16xi1>
    %178 = arith.xori %175, %cst_48 : vector<8x16xi1>
    %179 = arith.andi %177, %178 : vector<8x16xi1>
    %cst_49 = arith.constant 0.000000e+00 : f32
    %180 = vector.broadcast %cst_49 : f32 to vector<8x16xf32>
    %181 = arith.cmpf oeq, %173, %180 : vector<8x16xf32>
    %cst_50 = arith.constant 1.000000e+00 : f32
    %182 = vector.broadcast %cst_50 : f32 to vector<8x16xf32>
    %183 = arith.select %181, %182, %173 : vector<8x16xi1>, vector<8x16xf32>
    %cst_51 = arith.constant -1.000000e+00 : f32
    %184 = vector.broadcast %cst_51 : f32 to vector<8x16xf32>
    %185 = arith.divf %184, %183 : vector<8x16xf32>
    %cst_52 = arith.constant 1.000000e+00 : f32
    %186 = vector.broadcast %cst_52 : f32 to vector<8x16xf32>
    %187 = arith.subf %173, %186 : vector<8x16xf32>
    %cst_53 = arith.constant 1.000000e+00 : f32
    %188 = vector.broadcast %cst_53 : f32 to vector<8x16xf32>
    %189 = arith.addf %173, %188 : vector<8x16xf32>
    %190 = arith.divf %187, %189 : vector<8x16xf32>
    %191 = arith.select %179, %190, %173 : vector<8x16xi1>, vector<8x16xf32>
    %192 = arith.select %175, %185, %191 : vector<8x16xi1>, vector<8x16xf32>
    %cst_54 = arith.constant 0.785398185 : f32
    %cst_55 = arith.constant 0.000000e+00 : f32
    %193 = vector.broadcast %cst_54 : f32 to vector<8x16xf32>
    %194 = vector.broadcast %cst_55 : f32 to vector<8x16xf32>
    %195 = arith.select %179, %193, %194 : vector<8x16xi1>, vector<8x16xf32>
    %cst_56 = arith.constant 1.57079637 : f32
    %196 = vector.broadcast %cst_56 : f32 to vector<8x16xf32>
    %197 = arith.select %175, %196, %195 : vector<8x16xi1>, vector<8x16xf32>
    %198 = arith.mulf %192, %192 : vector<8x16xf32>
    %cst_57 = arith.constant 0.0805374458 : f32
    %199 = vector.broadcast %cst_57 : f32 to vector<8x16xf32>
    %200 = arith.mulf %199, %198 : vector<8x16xf32>
    %cst_58 = arith.constant 0.138776854 : f32
    %201 = vector.broadcast %cst_58 : f32 to vector<8x16xf32>
    %202 = arith.subf %200, %201 : vector<8x16xf32>
    %203 = arith.mulf %202, %198 : vector<8x16xf32>
    %cst_59 = arith.constant 0.199777111 : f32
    %204 = vector.broadcast %cst_59 : f32 to vector<8x16xf32>
    %205 = arith.addf %203, %204 : vector<8x16xf32>
    %206 = arith.mulf %205, %198 : vector<8x16xf32>
    %cst_60 = arith.constant 0.333329499 : f32
    %207 = vector.broadcast %cst_60 : f32 to vector<8x16xf32>
    %208 = arith.subf %206, %207 : vector<8x16xf32>
    %209 = arith.mulf %208, %198 : vector<8x16xf32>
    %210 = arith.mulf %209, %192 : vector<8x16xf32>
    %211 = arith.addf %197, %210 : vector<8x16xf32>
    %212 = arith.addf %211, %192 : vector<8x16xf32>
    %cst_61 = arith.constant 0.000000e+00 : f32
    %213 = vector.broadcast %cst_61 : f32 to vector<8x16xf32>
    %214 = arith.cmpf olt, %172, %213 : vector<8x16xf32>
    %cst_62 = arith.constant 0.000000e+00 : f32
    %215 = vector.broadcast %cst_62 : f32 to vector<8x16xf32>
    %216 = arith.subf %215, %212 : vector<8x16xf32>
    %217 = arith.select %214, %216, %212 : vector<8x16xi1>, vector<8x16xf32>
    %cst_63 = arith.constant 0.000000e+00 : f32
    %218 = vector.broadcast %cst_63 : f32 to vector<8x16xf32>
    %219 = arith.cmpf oge, %90, %218 : vector<8x16xf32>
    %cst_64 = arith.constant 3.14159274 : f32
    %220 = vector.broadcast %cst_64 : f32 to vector<8x16xf32>
    %221 = arith.addf %217, %220 : vector<8x16xf32>
    %cst_65 = arith.constant 3.14159274 : f32
    %222 = vector.broadcast %cst_65 : f32 to vector<8x16xf32>
    %223 = arith.subf %217, %222 : vector<8x16xf32>
    %224 = arith.select %219, %221, %223 : vector<8x16xi1>, vector<8x16xf32>
    %cst_66 = arith.constant 0.000000e+00 : f32
    %225 = vector.broadcast %cst_66 : f32 to vector<8x16xf32>
    %226 = arith.cmpf ogt, %90, %225 : vector<8x16xf32>
    %cst_67 = arith.constant 0.000000e+00 : f32
    %227 = vector.broadcast %cst_67 : f32 to vector<8x16xf32>
    %228 = arith.cmpf olt, %90, %227 : vector<8x16xf32>
    %cst_68 = arith.constant -1.57079637 : f32
    %cst_69 = arith.constant 0.000000e+00 : f32
    %229 = vector.broadcast %cst_68 : f32 to vector<8x16xf32>
    %230 = vector.broadcast %cst_69 : f32 to vector<8x16xf32>
    %231 = arith.select %228, %229, %230 : vector<8x16xi1>, vector<8x16xf32>
    %cst_70 = arith.constant 1.57079637 : f32
    %232 = vector.broadcast %cst_70 : f32 to vector<8x16xf32>
    %233 = arith.select %226, %232, %231 : vector<8x16xi1>, vector<8x16xf32>
    %cst_71 = arith.constant 0.000000e+00 : f32
    %234 = vector.broadcast %cst_71 : f32 to vector<8x16xf32>
    %235 = arith.cmpf ogt, %167, %234 : vector<8x16xf32>
    %cst_72 = arith.constant 0.000000e+00 : f32
    %236 = vector.broadcast %cst_72 : f32 to vector<8x16xf32>
    %237 = arith.cmpf olt, %167, %236 : vector<8x16xf32>
    %238 = arith.select %237, %224, %233 : vector<8x16xi1>, vector<8x16xf32>
    %239 = arith.select %235, %217, %238 : vector<8x16xi1>, vector<8x16xf32>
    %240 = arith.addf %91, %92 : vector<8x16xf32>
    %241 = arith.addf %240, %93 : vector<8x16xf32>
    %242 = math.sqrt %241 : vector<8x16xf32>
    %cst_73 = arith.constant 0.000000e+00 : f32
    %243 = vector.broadcast %cst_73 : f32 to vector<8x16xf32>
    %244 = arith.subf %243, %242 : vector<8x16xf32>
    %245 = math.exp %244 : vector<8x16xf32>
    %cst_74 = arith.constant dense<0xFF800000> : vector<16xf32>
    %246 = vector.multi_reduction <maximumf>, %242, %cst_74 [0] : vector<8x16xf32> to vector<16xf32>
    %247 = vector.shape_cast %246 : vector<16xf32> to vector<1x16xf32>
    %248 = arith.mulf %247, %247 : vector<1x16xf32>
    %249 = arith.mulf %247, %248 : vector<1x16xf32>
    %cst_75 = arith.constant dense<0.000000e+00> : vector<16xf32>
    %250 = vector.multi_reduction <add>, %79, %cst_75 [0] : vector<8x16xf32> to vector<16xf32>
    %251 = vector.shape_cast %250 : vector<16xf32> to vector<1x16xf32>
    %cst_76 = arith.constant 1.250000e-01 : f32
    %252 = vector.broadcast %cst_76 : f32 to vector<1x16xf32>
    %253 = arith.mulf %251, %252 : vector<1x16xf32>
    %254 = arith.subf %82, %253 : vector<1x16xf32>
    %cst_77 = arith.constant dense<0.000000e+00> : vector<16xf32>
    %255 = vector.multi_reduction <add>, %80, %cst_77 [0] : vector<8x16xf32> to vector<16xf32>
    %256 = vector.shape_cast %255 : vector<16xf32> to vector<1x16xf32>
    %cst_78 = arith.constant 1.250000e-01 : f32
    %257 = vector.broadcast %cst_78 : f32 to vector<1x16xf32>
    %258 = arith.mulf %256, %257 : vector<1x16xf32>
    %259 = arith.subf %83, %258 : vector<1x16xf32>
    %cst_79 = arith.constant dense<0.000000e+00> : vector<16xf32>
    %260 = vector.multi_reduction <add>, %81, %cst_79 [0] : vector<8x16xf32> to vector<16xf32>
    %261 = vector.shape_cast %260 : vector<16xf32> to vector<1x16xf32>
    %cst_80 = arith.constant 1.250000e-01 : f32
    %262 = vector.broadcast %cst_80 : f32 to vector<1x16xf32>
    %263 = arith.mulf %261, %262 : vector<1x16xf32>
    %264 = arith.subf %84, %263 : vector<1x16xf32>
    %cst_81 = arith.constant 0.000000e+00 : f32
    %265 = vector.broadcast %cst_81 : f32 to vector<1x16xf32>
    %266 = arith.cmpf oeq, %254, %265 : vector<1x16xf32>
    %cst_82 = arith.constant 1.000000e+00 : f32
    %267 = vector.broadcast %cst_82 : f32 to vector<1x16xf32>
    %268 = arith.select %266, %267, %254 : vector<1x16xi1>, vector<1x16xf32>
    %269 = arith.divf %259, %268 : vector<1x16xf32>
    %270 = math.absf %269 : vector<1x16xf32>
    %cst_83 = arith.constant 2.41421366 : f32
    %271 = vector.broadcast %cst_83 : f32 to vector<1x16xf32>
    %272 = arith.cmpf ogt, %270, %271 : vector<1x16xf32>
    %cst_84 = arith.constant 0.414213568 : f32
    %273 = vector.broadcast %cst_84 : f32 to vector<1x16xf32>
    %274 = arith.cmpf ogt, %270, %273 : vector<1x16xf32>
    %cst_85 = arith.constant dense<true> : vector<1x16xi1>
    %275 = arith.xori %272, %cst_85 : vector<1x16xi1>
    %276 = arith.andi %274, %275 : vector<1x16xi1>
    %cst_86 = arith.constant 0.000000e+00 : f32
    %277 = vector.broadcast %cst_86 : f32 to vector<1x16xf32>
    %278 = arith.cmpf oeq, %270, %277 : vector<1x16xf32>
    %cst_87 = arith.constant 1.000000e+00 : f32
    %279 = vector.broadcast %cst_87 : f32 to vector<1x16xf32>
    %280 = arith.select %278, %279, %270 : vector<1x16xi1>, vector<1x16xf32>
    %cst_88 = arith.constant -1.000000e+00 : f32
    %281 = vector.broadcast %cst_88 : f32 to vector<1x16xf32>
    %282 = arith.divf %281, %280 : vector<1x16xf32>
    %cst_89 = arith.constant 1.000000e+00 : f32
    %283 = vector.broadcast %cst_89 : f32 to vector<1x16xf32>
    %284 = arith.subf %270, %283 : vector<1x16xf32>
    %cst_90 = arith.constant 1.000000e+00 : f32
    %285 = vector.broadcast %cst_90 : f32 to vector<1x16xf32>
    %286 = arith.addf %270, %285 : vector<1x16xf32>
    %287 = arith.divf %284, %286 : vector<1x16xf32>
    %288 = arith.select %276, %287, %270 : vector<1x16xi1>, vector<1x16xf32>
    %289 = arith.select %272, %282, %288 : vector<1x16xi1>, vector<1x16xf32>
    %cst_91 = arith.constant 0.785398185 : f32
    %cst_92 = arith.constant 0.000000e+00 : f32
    %290 = vector.broadcast %cst_91 : f32 to vector<1x16xf32>
    %291 = vector.broadcast %cst_92 : f32 to vector<1x16xf32>
    %292 = arith.select %276, %290, %291 : vector<1x16xi1>, vector<1x16xf32>
    %cst_93 = arith.constant 1.57079637 : f32
    %293 = vector.broadcast %cst_93 : f32 to vector<1x16xf32>
    %294 = arith.select %272, %293, %292 : vector<1x16xi1>, vector<1x16xf32>
    %295 = arith.mulf %289, %289 : vector<1x16xf32>
    %cst_94 = arith.constant 0.0805374458 : f32
    %296 = vector.broadcast %cst_94 : f32 to vector<1x16xf32>
    %297 = arith.mulf %296, %295 : vector<1x16xf32>
    %cst_95 = arith.constant 0.138776854 : f32
    %298 = vector.broadcast %cst_95 : f32 to vector<1x16xf32>
    %299 = arith.subf %297, %298 : vector<1x16xf32>
    %300 = arith.mulf %299, %295 : vector<1x16xf32>
    %cst_96 = arith.constant 0.199777111 : f32
    %301 = vector.broadcast %cst_96 : f32 to vector<1x16xf32>
    %302 = arith.addf %300, %301 : vector<1x16xf32>
    %303 = arith.mulf %302, %295 : vector<1x16xf32>
    %cst_97 = arith.constant 0.333329499 : f32
    %304 = vector.broadcast %cst_97 : f32 to vector<1x16xf32>
    %305 = arith.subf %303, %304 : vector<1x16xf32>
    %306 = arith.mulf %305, %295 : vector<1x16xf32>
    %307 = arith.mulf %306, %289 : vector<1x16xf32>
    %308 = arith.addf %294, %307 : vector<1x16xf32>
    %309 = arith.addf %308, %289 : vector<1x16xf32>
    %cst_98 = arith.constant 0.000000e+00 : f32
    %310 = vector.broadcast %cst_98 : f32 to vector<1x16xf32>
    %311 = arith.cmpf olt, %269, %310 : vector<1x16xf32>
    %cst_99 = arith.constant 0.000000e+00 : f32
    %312 = vector.broadcast %cst_99 : f32 to vector<1x16xf32>
    %313 = arith.subf %312, %309 : vector<1x16xf32>
    %314 = arith.select %311, %313, %309 : vector<1x16xi1>, vector<1x16xf32>
    %cst_100 = arith.constant 0.000000e+00 : f32
    %315 = vector.broadcast %cst_100 : f32 to vector<1x16xf32>
    %316 = arith.cmpf oge, %259, %315 : vector<1x16xf32>
    %cst_101 = arith.constant 3.14159274 : f32
    %317 = vector.broadcast %cst_101 : f32 to vector<1x16xf32>
    %318 = arith.addf %314, %317 : vector<1x16xf32>
    %cst_102 = arith.constant 3.14159274 : f32
    %319 = vector.broadcast %cst_102 : f32 to vector<1x16xf32>
    %320 = arith.subf %314, %319 : vector<1x16xf32>
    %321 = arith.select %316, %318, %320 : vector<1x16xi1>, vector<1x16xf32>
    %cst_103 = arith.constant 0.000000e+00 : f32
    %322 = vector.broadcast %cst_103 : f32 to vector<1x16xf32>
    %323 = arith.cmpf ogt, %259, %322 : vector<1x16xf32>
    %cst_104 = arith.constant 0.000000e+00 : f32
    %324 = vector.broadcast %cst_104 : f32 to vector<1x16xf32>
    %325 = arith.cmpf olt, %259, %324 : vector<1x16xf32>
    %cst_105 = arith.constant -1.57079637 : f32
    %cst_106 = arith.constant 0.000000e+00 : f32
    %326 = vector.broadcast %cst_105 : f32 to vector<1x16xf32>
    %327 = vector.broadcast %cst_106 : f32 to vector<1x16xf32>
    %328 = arith.select %325, %326, %327 : vector<1x16xi1>, vector<1x16xf32>
    %cst_107 = arith.constant 1.57079637 : f32
    %329 = vector.broadcast %cst_107 : f32 to vector<1x16xf32>
    %330 = arith.select %323, %329, %328 : vector<1x16xi1>, vector<1x16xf32>
    %cst_108 = arith.constant 0.000000e+00 : f32
    %331 = vector.broadcast %cst_108 : f32 to vector<1x16xf32>
    %332 = arith.cmpf ogt, %254, %331 : vector<1x16xf32>
    %cst_109 = arith.constant 0.000000e+00 : f32
    %333 = vector.broadcast %cst_109 : f32 to vector<1x16xf32>
    %334 = arith.cmpf olt, %254, %333 : vector<1x16xf32>
    %335 = arith.select %334, %321, %330 : vector<1x16xi1>, vector<1x16xf32>
    %336 = arith.select %332, %314, %335 : vector<1x16xi1>, vector<1x16xf32>
    %337 = arith.mulf %254, %254 : vector<1x16xf32>
    %338 = arith.mulf %259, %259 : vector<1x16xf32>
    %339 = arith.addf %337, %338 : vector<1x16xf32>
    %340 = math.sqrt %339 : vector<1x16xf32>
    %cst_110 = arith.constant 0.000000e+00 : f32
    %341 = vector.broadcast %cst_110 : f32 to vector<1x16xf32>
    %342 = arith.cmpf oeq, %340, %341 : vector<1x16xf32>
    %cst_111 = arith.constant 1.000000e+00 : f32
    %343 = vector.broadcast %cst_111 : f32 to vector<1x16xf32>
    %344 = arith.select %342, %343, %340 : vector<1x16xi1>, vector<1x16xf32>
    %345 = arith.divf %264, %344 : vector<1x16xf32>
    %346 = math.absf %345 : vector<1x16xf32>
    %cst_112 = arith.constant 2.41421366 : f32
    %347 = vector.broadcast %cst_112 : f32 to vector<1x16xf32>
    %348 = arith.cmpf ogt, %346, %347 : vector<1x16xf32>
    %cst_113 = arith.constant 0.414213568 : f32
    %349 = vector.broadcast %cst_113 : f32 to vector<1x16xf32>
    %350 = arith.cmpf ogt, %346, %349 : vector<1x16xf32>
    %cst_114 = arith.constant dense<true> : vector<1x16xi1>
    %351 = arith.xori %348, %cst_114 : vector<1x16xi1>
    %352 = arith.andi %350, %351 : vector<1x16xi1>
    %cst_115 = arith.constant 0.000000e+00 : f32
    %353 = vector.broadcast %cst_115 : f32 to vector<1x16xf32>
    %354 = arith.cmpf oeq, %346, %353 : vector<1x16xf32>
    %cst_116 = arith.constant 1.000000e+00 : f32
    %355 = vector.broadcast %cst_116 : f32 to vector<1x16xf32>
    %356 = arith.select %354, %355, %346 : vector<1x16xi1>, vector<1x16xf32>
    %cst_117 = arith.constant -1.000000e+00 : f32
    %357 = vector.broadcast %cst_117 : f32 to vector<1x16xf32>
    %358 = arith.divf %357, %356 : vector<1x16xf32>
    %cst_118 = arith.constant 1.000000e+00 : f32
    %359 = vector.broadcast %cst_118 : f32 to vector<1x16xf32>
    %360 = arith.subf %346, %359 : vector<1x16xf32>
    %cst_119 = arith.constant 1.000000e+00 : f32
    %361 = vector.broadcast %cst_119 : f32 to vector<1x16xf32>
    %362 = arith.addf %346, %361 : vector<1x16xf32>
    %363 = arith.divf %360, %362 : vector<1x16xf32>
    %364 = arith.select %352, %363, %346 : vector<1x16xi1>, vector<1x16xf32>
    %365 = arith.select %348, %358, %364 : vector<1x16xi1>, vector<1x16xf32>
    %cst_120 = arith.constant 0.785398185 : f32
    %cst_121 = arith.constant 0.000000e+00 : f32
    %366 = vector.broadcast %cst_120 : f32 to vector<1x16xf32>
    %367 = vector.broadcast %cst_121 : f32 to vector<1x16xf32>
    %368 = arith.select %352, %366, %367 : vector<1x16xi1>, vector<1x16xf32>
    %cst_122 = arith.constant 1.57079637 : f32
    %369 = vector.broadcast %cst_122 : f32 to vector<1x16xf32>
    %370 = arith.select %348, %369, %368 : vector<1x16xi1>, vector<1x16xf32>
    %371 = arith.mulf %365, %365 : vector<1x16xf32>
    %cst_123 = arith.constant 0.0805374458 : f32
    %372 = vector.broadcast %cst_123 : f32 to vector<1x16xf32>
    %373 = arith.mulf %372, %371 : vector<1x16xf32>
    %cst_124 = arith.constant 0.138776854 : f32
    %374 = vector.broadcast %cst_124 : f32 to vector<1x16xf32>
    %375 = arith.subf %373, %374 : vector<1x16xf32>
    %376 = arith.mulf %375, %371 : vector<1x16xf32>
    %cst_125 = arith.constant 0.199777111 : f32
    %377 = vector.broadcast %cst_125 : f32 to vector<1x16xf32>
    %378 = arith.addf %376, %377 : vector<1x16xf32>
    %379 = arith.mulf %378, %371 : vector<1x16xf32>
    %cst_126 = arith.constant 0.333329499 : f32
    %380 = vector.broadcast %cst_126 : f32 to vector<1x16xf32>
    %381 = arith.subf %379, %380 : vector<1x16xf32>
    %382 = arith.mulf %381, %371 : vector<1x16xf32>
    %383 = arith.mulf %382, %365 : vector<1x16xf32>
    %384 = arith.addf %370, %383 : vector<1x16xf32>
    %385 = arith.addf %384, %365 : vector<1x16xf32>
    %cst_127 = arith.constant 0.000000e+00 : f32
    %386 = vector.broadcast %cst_127 : f32 to vector<1x16xf32>
    %387 = arith.cmpf olt, %345, %386 : vector<1x16xf32>
    %cst_128 = arith.constant 0.000000e+00 : f32
    %388 = vector.broadcast %cst_128 : f32 to vector<1x16xf32>
    %389 = arith.subf %388, %385 : vector<1x16xf32>
    %390 = arith.select %387, %389, %385 : vector<1x16xi1>, vector<1x16xf32>
    %cst_129 = arith.constant 0.000000e+00 : f32
    %391 = vector.broadcast %cst_129 : f32 to vector<1x16xf32>
    %392 = arith.cmpf oge, %264, %391 : vector<1x16xf32>
    %cst_130 = arith.constant 3.14159274 : f32
    %393 = vector.broadcast %cst_130 : f32 to vector<1x16xf32>
    %394 = arith.addf %390, %393 : vector<1x16xf32>
    %cst_131 = arith.constant 3.14159274 : f32
    %395 = vector.broadcast %cst_131 : f32 to vector<1x16xf32>
    %396 = arith.subf %390, %395 : vector<1x16xf32>
    %397 = arith.select %392, %394, %396 : vector<1x16xi1>, vector<1x16xf32>
    %cst_132 = arith.constant 0.000000e+00 : f32
    %398 = vector.broadcast %cst_132 : f32 to vector<1x16xf32>
    %399 = arith.cmpf ogt, %264, %398 : vector<1x16xf32>
    %cst_133 = arith.constant 0.000000e+00 : f32
    %400 = vector.broadcast %cst_133 : f32 to vector<1x16xf32>
    %401 = arith.cmpf olt, %264, %400 : vector<1x16xf32>
    %cst_134 = arith.constant -1.57079637 : f32
    %cst_135 = arith.constant 0.000000e+00 : f32
    %402 = vector.broadcast %cst_134 : f32 to vector<1x16xf32>
    %403 = vector.broadcast %cst_135 : f32 to vector<1x16xf32>
    %404 = arith.select %401, %402, %403 : vector<1x16xi1>, vector<1x16xf32>
    %cst_136 = arith.constant 1.57079637 : f32
    %405 = vector.broadcast %cst_136 : f32 to vector<1x16xf32>
    %406 = arith.select %399, %405, %404 : vector<1x16xi1>, vector<1x16xf32>
    %cst_137 = arith.constant 0.000000e+00 : f32
    %407 = vector.broadcast %cst_137 : f32 to vector<1x16xf32>
    %408 = arith.cmpf ogt, %340, %407 : vector<1x16xf32>
    %cst_138 = arith.constant 0.000000e+00 : f32
    %409 = vector.broadcast %cst_138 : f32 to vector<1x16xf32>
    %410 = arith.cmpf olt, %340, %409 : vector<1x16xf32>
    %411 = arith.select %410, %397, %406 : vector<1x16xi1>, vector<1x16xf32>
    %412 = arith.select %408, %390, %411 : vector<1x16xi1>, vector<1x16xf32>
    %413 = vector.broadcast %336 : vector<1x16xf32> to vector<8x16xf32>
    %414 = arith.subf %165, %413 : vector<8x16xf32>
    %415 = vector.broadcast %412 : vector<1x16xf32> to vector<8x16xf32>
    %416 = arith.subf %239, %415 : vector<8x16xf32>
    %417 = vector.extract_strided_slice %1 {offsets = [0, 0], sizes = [1, 16], strides = [1, 1]} : vector<3x16xf32> to vector<1x16xf32>
    %418 = arith.mulf %417, %417 : vector<1x16xf32>
    %419 = vector.extract_strided_slice %1 {offsets = [1, 0], sizes = [1, 16], strides = [1, 1]} : vector<3x16xf32> to vector<1x16xf32>
    %420 = arith.mulf %419, %419 : vector<1x16xf32>
    %421 = arith.addf %418, %420 : vector<1x16xf32>
    %422 = vector.extract_strided_slice %1 {offsets = [2, 0], sizes = [1, 16], strides = [1, 1]} : vector<3x16xf32> to vector<1x16xf32>
    %423 = arith.mulf %422, %422 : vector<1x16xf32>
    %424 = arith.addf %421, %423 : vector<1x16xf32>
    %425 = math.sqrt %424 : vector<1x16xf32>
    %cst_139 = arith.constant dense<0xFF800000> : vector<1xf32>
    %426 = vector.multi_reduction <maximumf>, %425, %cst_139 [1] : vector<1x16xf32> to vector<1xf32>
    %427 = vector.shape_cast %426 : vector<1xf32> to vector<1x1xf32>
    %428 = arith.mulf %427, %427 : vector<1x1xf32>
    %429 = arith.mulf %427, %428 : vector<1x1xf32>
    %430 = vector.broadcast %429 : vector<1x1xf32> to vector<1x16xf32>
    %431 = arith.divf %249, %430 : vector<1x16xf32>
    %c0_140 = arith.constant 0 : index
    %c0_141 = arith.constant 0 : index
    %c0_142 = arith.constant 0 : index
    %c0_143 = arith.constant 0 : index
    %432 = vector.load %arg5[%c0_140, %c0_141, %c0_142, %c0_143] : memref<1x9x8x16xf32, #tpu.memory_space<vmem>>, vector<1x1x8x16xf32>
    %433 = vector.shape_cast %432 : vector<1x1x8x16xf32> to vector<8x16xf32>
    %434 = vector.shape_cast %414 : vector<8x16xf32> to vector<1x1x8x16xf32>
    tpu.vector_store %arg5[%c0_140, %c0_141, %c0_142, %c0_143], %434 {strides = array<i32>} : memref<1x9x8x16xf32, #tpu.memory_space<vmem>>, vector<1x1x8x16xf32>,
    %c0_144 = arith.constant 0 : index
    %c1 = arith.constant 1 : index
    %c0_145 = arith.constant 0 : index
    %c0_146 = arith.constant 0 : index
    %435 = vector.load %arg5[%c0_144, %c1, %c0_145, %c0_146] : memref<1x9x8x16xf32, #tpu.memory_space<vmem>>, vector<1x1x8x16xf32>
    %436 = vector.shape_cast %435 : vector<1x1x8x16xf32> to vector<8x16xf32>
    %437 = vector.shape_cast %416 : vector<8x16xf32> to vector<1x1x8x16xf32>
    tpu.vector_store %arg5[%c0_144, %c1, %c0_145, %c0_146], %437 {strides = array<i32>} : memref<1x9x8x16xf32, #tpu.memory_space<vmem>>, vector<1x1x8x16xf32>,
    %c0_147 = arith.constant 0 : index
    %c2 = arith.constant 2 : index
    %c0_148 = arith.constant 0 : index
    %c0_149 = arith.constant 0 : index
    %438 = vector.load %arg5[%c0_147, %c2, %c0_148, %c0_149] : memref<1x9x8x16xf32, #tpu.memory_space<vmem>>, vector<1x1x8x16xf32>
    %439 = vector.shape_cast %438 : vector<1x1x8x16xf32> to vector<8x16xf32>
    %440 = vector.shape_cast %242 : vector<8x16xf32> to vector<1x1x8x16xf32>
    tpu.vector_store %arg5[%c0_147, %c2, %c0_148, %c0_149], %440 {strides = array<i32>} : memref<1x9x8x16xf32, #tpu.memory_space<vmem>>, vector<1x1x8x16xf32>,
    %441 = vector.shape_cast %82 : vector<1x16xf32> to vector<1x16xf32>
    %442 = vector.broadcast %441 : vector<1x16xf32> to vector<8x16xf32>
    %c0_150 = arith.constant 0 : index
    %c3 = arith.constant 3 : index
    %c0_151 = arith.constant 0 : index
    %c0_152 = arith.constant 0 : index
    %443 = vector.load %arg5[%c0_150, %c3, %c0_151, %c0_152] : memref<1x9x8x16xf32, #tpu.memory_space<vmem>>, vector<1x1x8x16xf32>
    %444 = vector.shape_cast %443 : vector<1x1x8x16xf32> to vector<8x16xf32>
    %445 = vector.shape_cast %442 : vector<8x16xf32> to vector<1x1x8x16xf32>
    tpu.vector_store %arg5[%c0_150, %c3, %c0_151, %c0_152], %445 {strides = array<i32>} : memref<1x9x8x16xf32, #tpu.memory_space<vmem>>, vector<1x1x8x16xf32>,
    %446 = vector.shape_cast %83 : vector<1x16xf32> to vector<1x16xf32>
    %447 = vector.broadcast %446 : vector<1x16xf32> to vector<8x16xf32>
    %c0_153 = arith.constant 0 : index
    %c4 = arith.constant 4 : index
    %c0_154 = arith.constant 0 : index
    %c0_155 = arith.constant 0 : index
    %448 = vector.load %arg5[%c0_153, %c4, %c0_154, %c0_155] : memref<1x9x8x16xf32, #tpu.memory_space<vmem>>, vector<1x1x8x16xf32>
    %449 = vector.shape_cast %448 : vector<1x1x8x16xf32> to vector<8x16xf32>
    %450 = vector.shape_cast %447 : vector<8x16xf32> to vector<1x1x8x16xf32>
    tpu.vector_store %arg5[%c0_153, %c4, %c0_154, %c0_155], %450 {strides = array<i32>} : memref<1x9x8x16xf32, #tpu.memory_space<vmem>>, vector<1x1x8x16xf32>,
    %451 = vector.shape_cast %84 : vector<1x16xf32> to vector<1x16xf32>
    %452 = vector.broadcast %451 : vector<1x16xf32> to vector<8x16xf32>
    %c0_156 = arith.constant 0 : index
    %c5 = arith.constant 5 : index
    %c0_157 = arith.constant 0 : index
    %c0_158 = arith.constant 0 : index
    %453 = vector.load %arg5[%c0_156, %c5, %c0_157, %c0_158] : memref<1x9x8x16xf32, #tpu.memory_space<vmem>>, vector<1x1x8x16xf32>
    %454 = vector.shape_cast %453 : vector<1x1x8x16xf32> to vector<8x16xf32>
    %455 = vector.shape_cast %452 : vector<8x16xf32> to vector<1x1x8x16xf32>
    tpu.vector_store %arg5[%c0_156, %c5, %c0_157, %c0_158], %455 {strides = array<i32>} : memref<1x9x8x16xf32, #tpu.memory_space<vmem>>, vector<1x1x8x16xf32>,
    %c0_159 = arith.constant 0 : index
    %c6 = arith.constant 6 : index
    %c0_160 = arith.constant 0 : index
    %c0_161 = arith.constant 0 : index
    %456 = vector.load %arg5[%c0_159, %c6, %c0_160, %c0_161] : memref<1x9x8x16xf32, #tpu.memory_space<vmem>>, vector<1x1x8x16xf32>
    %457 = vector.shape_cast %456 : vector<1x1x8x16xf32> to vector<8x16xf32>
    %458 = vector.shape_cast %79 : vector<8x16xf32> to vector<1x1x8x16xf32>
    tpu.vector_store %arg5[%c0_159, %c6, %c0_160, %c0_161], %458 {strides = array<i32>} : memref<1x9x8x16xf32, #tpu.memory_space<vmem>>, vector<1x1x8x16xf32>,
    %c0_162 = arith.constant 0 : index
    %c7 = arith.constant 7 : index
    %c0_163 = arith.constant 0 : index
    %c0_164 = arith.constant 0 : index
    %459 = vector.load %arg5[%c0_162, %c7, %c0_163, %c0_164] : memref<1x9x8x16xf32, #tpu.memory_space<vmem>>, vector<1x1x8x16xf32>
    %460 = vector.shape_cast %459 : vector<1x1x8x16xf32> to vector<8x16xf32>
    %461 = vector.shape_cast %80 : vector<8x16xf32> to vector<1x1x8x16xf32>
    tpu.vector_store %arg5[%c0_162, %c7, %c0_163, %c0_164], %461 {strides = array<i32>} : memref<1x9x8x16xf32, #tpu.memory_space<vmem>>, vector<1x1x8x16xf32>,
    %c0_165 = arith.constant 0 : index
    %c8 = arith.constant 8 : index
    %c0_166 = arith.constant 0 : index
    %c0_167 = arith.constant 0 : index
    %462 = vector.load %arg5[%c0_165, %c8, %c0_166, %c0_167] : memref<1x9x8x16xf32, #tpu.memory_space<vmem>>, vector<1x1x8x16xf32>
    %463 = vector.shape_cast %462 : vector<1x1x8x16xf32> to vector<8x16xf32>
    %464 = vector.shape_cast %81 : vector<8x16xf32> to vector<1x1x8x16xf32>
    tpu.vector_store %arg5[%c0_165, %c8, %c0_166, %c0_167], %464 {strides = array<i32>} : memref<1x9x8x16xf32, #tpu.memory_space<vmem>>, vector<1x1x8x16xf32>,
    %c0_168 = arith.constant 0 : index
    %c0_169 = arith.constant 0 : index
    %c0_170 = arith.constant 0 : index
    %465 = vector.load %arg6[%c0_168, %c0_169, %c0_170] : memref<1x8x16xf32, #tpu.memory_space<vmem>>, vector<1x8x16xf32>
    %466 = vector.shape_cast %465 : vector<1x8x16xf32> to vector<8x16xf32>
    %467 = vector.shape_cast %245 : vector<8x16xf32> to vector<1x8x16xf32>
    tpu.vector_store %arg6[%c0_168, %c0_169, %c0_170], %467 {strides = array<i32>} : memref<1x8x16xf32, #tpu.memory_space<vmem>>, vector<1x8x16xf32>,
    %c0_171 = arith.constant 0 : index
    %c0_172 = arith.constant 0 : index
    %c0_173 = arith.constant 0 : index
    %468 = vector.load %arg7[%c0_171, %c0_172, %c0_173] : memref<1x1x16xf32, #tpu.memory_space<vmem>>, vector<1x1x16xf32>
    %469 = vector.shape_cast %468 : vector<1x1x16xf32> to vector<1x16xf32>
    %470 = vector.shape_cast %431 : vector<1x16xf32> to vector<1x1x16xf32>
    tpu.vector_store %arg7[%c0_171, %c0_172, %c0_173], %470 {strides = array<i32>} : memref<1x1x16xf32, #tpu.memory_space<vmem>>, vector<1x1x16xf32>,
    return
  }
  func.func @transform_0(%arg0: i32, %arg1: i32) -> (i32, i32, i32) {
    %c0_i32 = arith.constant 0 : i32
    %c0_i32_0 = arith.constant 0 : i32
    %c0_i32_1 = arith.constant 0 : i32
    return %arg0, %c0_i32, %c0_i32_0 : i32, i32, i32
  }
  func.func @transform_1(%arg0: i32, %arg1: i32) -> (i32, i32, i32) {
    %c0_i32 = arith.constant 0 : i32
    %c0_i32_0 = arith.constant 0 : i32
    return %arg0, %c0_i32, %arg1 : i32, i32, i32
  }
  func.func @transform_2(%arg0: i32, %arg1: i32) -> (i32, i32, i32) {
    %c0_i32 = arith.constant 0 : i32
    %c0_i32_0 = arith.constant 0 : i32
    return %arg0, %c0_i32, %arg1 : i32, i32, i32
  }
  func.func @transform_3(%arg0: i32, %arg1: i32) -> (i32, i32, i32, i32) {
    %c0_i32 = arith.constant 0 : i32
    %c0_i32_0 = arith.constant 0 : i32
    %c0_i32_1 = arith.constant 0 : i32
    return %arg0, %c0_i32, %c0_i32_0, %arg1 : i32, i32, i32, i32
  }
  func.func @transform_4(%arg0: i32, %arg1: i32) -> (i32, i32, i32) {
    %c0_i32 = arith.constant 0 : i32
    %c0_i32_0 = arith.constant 0 : i32
    return %arg0, %c0_i32, %arg1 : i32, i32, i32
  }
  func.func @transform_5(%arg0: i32, %arg1: i32) -> (i32, i32, i32) {
    %c0_i32 = arith.constant 0 : i32
    %c0_i32_0 = arith.constant 0 : i32
    return %arg0, %c0_i32, %arg1 : i32, i32, i32
  }
}

</mosaic_0001>

<llo_original>
// kernel: tpu_custom_call.1
$region0: #{tpu_custom_call.1}
  #allocation0 [shape = 'u32[]', space=smem, size = 0x4, offset = 0x4, fixed_abs, tag = 'smem constant byte address 0x4 - core index']
  #allocation1 [shape = 'u32[144,128]{1,0:T(1,128)}', space=vmem, size = 0x12000, scoped, tag = 'internal scratch']
  %s0 = inlined_call_operand.vmem [shape: f32[2,3,16], index: 0, kind: input, shape index: {}]
  %s1 = inlined_call_operand.vmem [shape: f32[2,3,16], index: 1, kind: input, shape index: {}]
  %s2 = inlined_call_operand.vmem [shape: s32[2,8,16], index: 2, kind: input, shape index: {}]
  %s3 = inlined_call_operand.hbm [shape: f32[2,9,8,16], index: 3, kind: output, shape index: {0}]
  %s4 = inlined_call_operand.hbm [shape: f32[2,8,16], index: 4, kind: output, shape index: {1}]
  %s5 = inlined_call_operand.hbm [shape: f32[2,1,16], index: 5, kind: output, shape index: {2}]
  %6 = xla_tuple %s3, %s4, %s5
  %s7 = sld [smem:[#allocation0]]
  $region61: #{tpu_custom_call.1} parent=0
    _
  %s9 = ssub.s32 1, %s7
  %s10 = scalar_select 0, %s9, %s7
  $region1: #{tpu_custom_call.1} parent=0
    #allocation2 [shape = 'u8[73728]{0}', space=vmem, size = 0x12000, scoped, tag = 'output window, operand 0']
    #allocation3 [shape = 's32[2]{0}', space=sflag, size = 0x8, scoped, tag = 'scoped memory for tpu_custom_call.1']
    #allocation4 [shape = 'u8[8192]{0}', space=vmem, size = 0x2000, scoped, tag = 'output window, operand 1']
    #allocation5 [shape = 's32[2]{0}', space=sflag, size = 0x8, scoped, tag = 'scoped memory for tpu_custom_call.1']
    #allocation6 [shape = 'u8[1024]{0}', space=vmem, size = 0x400, scoped, tag = 'output window, operand 2']
    %11 = vsyncpa [#allocation3], 0
    %s12 = scalar_lea.sflag [#allocation3], 1
    %13 = vsyncpa %s12, 0
    %14 = vsyncpa [#allocation5], 0
    %s15 = scalar_lea.sflag [#allocation5], 1
    %16 = vsyncpa %s15, 0
    loop: start=0, step=1, limit=4
    $region2: #{tpu_custom_call.1} parent=1 // loop_pre_header
      _
    $region3: #{tpu_custom_call.1} parent=1 // loop_header
      %s18 = sphi 0, %s22
      %p19 = scmp.ge.s32.totalorder %s18, 4
      %s25 = sphi 0, %s37
      %s26 = sphi 0, %s33
      %s27 = sphi 0, %s25
      %s28 = sphi 0, %s26
      %s29 = sphi 0, %s27
      %s30 = sphi 0, %s28
      %s40 = sphi 0, %s42
      %s43 = sphi 0, %s40
      %s44 = sphi 0, %s43
      %s60 = sphi 0, %s44
      %s68 = sphi 0, %s70
      %s71 = sphi 0, %s68
      %s72 = sphi 0, %s71
      %s88 = sphi 0, %s72
      %s96 = sphi 0, %s98
      %s99 = sphi 0, %s96
      %s100 = sphi 0, %s99
      %s116 = sphi 0, %s100
      %s124 = sphi 0, %s126
      %s127 = sphi 0, %s124
      %s128 = sphi 0, %s127
      %s144 = sphi 0, %s128
      %s152 = sphi 0, %s154
      %s155 = sphi 0, %s152
      %s156 = sphi 0, %s155
      %s172 = sphi 0, %s156
      %s180 = sphi 0, %s182
      %s183 = sphi 0, %s180
      %s184 = sphi 0, %s183
      %s200 = sphi 0, %s184
    $region4: #{tpu_custom_call.1} parent=1 // loop_header_branch
      %21 = sbr.rel (%p19) target = $region8
    $region5: #{tpu_custom_call.1} parent=1 // loop_body
      %s23 = ssub.s32 %s18, 1
      %s24 = ssub.s32 %s18, 2
      %s31 = sadd.s32 1, %s26
      %p32 = scmp.ge.s32.totalorder %s31, 1
      %s33 = scalar_select %p32, 0, %s31
      %s34 = sadd.s32 1, %s25
      %s35 = scalar_select %p32, %s34, %s25
      %p36 = scmp.ge.s32.totalorder %s35, 2
      %s37 = scalar_select %p36, 0, %s35
      %s38 = ssub.s32 %s25, %s37
      %p39 = scmp.eq.s32.totalorder %s38, 0
      %s41 = sadd.s32 %s40, 1
      %s42 = scalar_select %p39, %s40, %s41
      %p45 = pneg %p39
      %p46 = scmp.eq.s32.totalorder %s18, 1
      %p47 = por %p45, %p46
      %p48 = scmp.ne.s32.totalorder %s40, %s43
      %p49 = scmp.eq.s32.totalorder %s18, 0
      %p50 = por %p48, %p49
      %p51 = scmp.ne.s32.totalorder %s40, %s43
      %p52 = scmp.eq.s32.totalorder %s23, 1
      %p53 = por %p51, %p52
      %p54 = scmp.ne.s32.totalorder %s43, %s44
      %p55 = scmp.eq.s32.totalorder %s23, 0
      %p56 = por %p54, %p55
      %p57 = scmp.ne.s32.totalorder %s43, %s44
      %p58 = scmp.eq.s32.totalorder %s24, 1
      %p59 = por %p57, %p58
      %p61 = scmp.ne.s32.totalorder %s44, %s60
      %p62 = scmp.eq.s32.totalorder %s24, 0
      %p63 = por %p61, %p62
      %s64 = ssub.s32 %s25, %s37
      %s65 = ssub.s32 %s26, %s33
      %s66 = sor.u32 %s64, %s65
      %p67 = scmp.eq.s32.totalorder %s66, 0
      %s69 = sadd.s32 %s68, 1
      %s70 = scalar_select %p67, %s68, %s69
      %p73 = pneg %p67
      %p74 = scmp.eq.s32.totalorder %s18, 1
      %p75 = por %p73, %p74
      %p76 = scmp.ne.s32.totalorder %s68, %s71
      %p77 = scmp.eq.s32.totalorder %s18, 0
      %p78 = por %p76, %p77
      %p79 = scmp.ne.s32.totalorder %s68, %s71
      %p80 = scmp.eq.s32.totalorder %s23, 1
      %p81 = por %p79, %p80
      %p82 = scmp.ne.s32.totalorder %s71, %s72
      %p83 = scmp.eq.s32.totalorder %s23, 0
      %p84 = por %p82, %p83
      %p85 = scmp.ne.s32.totalorder %s71, %s72
      %p86 = scmp.eq.s32.totalorder %s24, 1
      %p87 = por %p85, %p86
      %p89 = scmp.ne.s32.totalorder %s72, %s88
      %p90 = scmp.eq.s32.totalorder %s24, 0
      %p91 = por %p89, %p90
      %s92 = ssub.s32 %s25, %s37
      %s93 = ssub.s32 %s26, %s33
      %s94 = sor.u32 %s92, %s93
      %p95 = scmp.eq.s32.totalorder %s94, 0
      %s97 = sadd.s32 %s96, 1
      %s98 = scalar_select %p95, %s96, %s97
      %p101 = pneg %p95
      %p102 = scmp.eq.s32.totalorder %s18, 1
      %p103 = por %p101, %p102
      %p104 = scmp.ne.s32.totalorder %s96, %s99
      %p105 = scmp.eq.s32.totalorder %s18, 0
      %p106 = por %p104, %p105
      %p107 = scmp.ne.s32.totalorder %s96, %s99
      %p108 = scmp.eq.s32.totalorder %s23, 1
      %p109 = por %p107, %p108
      %p110 = scmp.ne.s32.totalorder %s99, %s100
      %p111 = scmp.eq.s32.totalorder %s23, 0
      %p112 = por %p110, %p111
      %p113 = scmp.ne.s32.totalorder %s99, %s100
      %p114 = scmp.eq.s32.totalorder %s24, 1
      %p115 = por %p113, %p114
      %p117 = scmp.ne.s32.totalorder %s100, %s116
      %p118 = scmp.eq.s32.totalorder %s24, 0
      %p119 = por %p117, %p118
      %s120 = ssub.s32 %s25, %s37
      %s121 = ssub.s32 %s26, %s33
      %s122 = sor.u32 %s120, %s121
      %p123 = scmp.eq.s32.totalorder %s122, 0
      %s125 = sadd.s32 %s124, 1
      %s126 = scalar_select %p123, %s124, %s125
      %p129 = pneg %p123
      %p130 = scmp.eq.s32.totalorder %s18, 1
      %p131 = por %p129, %p130
      %p132 = scmp.ne.s32.totalorder %s124, %s127
      %p133 = scmp.eq.s32.totalorder %s18, 0
      %p134 = por %p132, %p133
      %p135 = scmp.ne.s32.totalorder %s124, %s127
      %p136 = scmp.eq.s32.totalorder %s23, 1
      %p137 = por %p135, %p136
      %p138 = scmp.ne.s32.totalorder %s127, %s128
      %p139 = scmp.eq.s32.totalorder %s23, 0
      %p140 = por %p138, %p139
      %p141 = scmp.ne.s32.totalorder %s127, %s128
      %p142 = scmp.eq.s32.totalorder %s24, 1
      %p143 = por %p141, %p142
      %p145 = scmp.ne.s32.totalorder %s128, %s144
      %p146 = scmp.eq.s32.totalorder %s24, 0
      %p147 = por %p145, %p146
      %s148 = ssub.s32 %s25, %s37
      %s149 = ssub.s32 %s26, %s33
      %s150 = sor.u32 %s148, %s149
      %p151 = scmp.eq.s32.totalorder %s150, 0
      %s153 = sadd.s32 %s152, 1
      %s154 = scalar_select %p151, %s152, %s153
      %p157 = pneg %p151
      %p158 = scmp.eq.s32.totalorder %s18, 1
      %p159 = por %p157, %p158
      %p160 = scmp.ne.s32.totalorder %s152, %s155
      %p161 = scmp.eq.s32.totalorder %s18, 0
      %p162 = por %p160, %p161
      %p163 = scmp.ne.s32.totalorder %s152, %s155
      %p164 = scmp.eq.s32.totalorder %s23, 1
      %p165 = por %p163, %p164
      %p166 = scmp.ne.s32.totalorder %s155, %s156
      %p167 = scmp.eq.s32.totalorder %s23, 0
      %p168 = por %p166, %p167
      %p169 = scmp.ne.s32.totalorder %s155, %s156
      %p170 = scmp.eq.s32.totalorder %s24, 1
      %p171 = por %p169, %p170
      %p173 = scmp.ne.s32.totalorder %s156, %s172
      %p174 = scmp.eq.s32.totalorder %s24, 0
      %p175 = por %p173, %p174
      %s176 = ssub.s32 %s25, %s37
      %s177 = ssub.s32 %s26, %s33
      %s178 = sor.u32 %s176, %s177
      %p179 = scmp.eq.s32.totalorder %s178, 0
      %s181 = sadd.s32 %s180, 1
      %s182 = scalar_select %p179, %s180, %s181
      %p185 = pneg %p179
      %p186 = scmp.eq.s32.totalorder %s18, 1
      %p187 = por %p185, %p186
      %p188 = scmp.ne.s32.totalorder %s180, %s183
      %p189 = scmp.eq.s32.totalorder %s18, 0
      %p190 = por %p188, %p189
      %p191 = scmp.ne.s32.totalorder %s180, %s183
      %p192 = scmp.eq.s32.totalorder %s23, 1
      %p193 = por %p191, %p192
      %p194 = scmp.ne.s32.totalorder %s183, %s184
      %p195 = scmp.eq.s32.totalorder %s23, 0
      %p196 = por %p194, %p195
      %p197 = scmp.ne.s32.totalorder %s183, %s184
      %p198 = scmp.eq.s32.totalorder %s24, 1
      %p199 = por %p197, %p198
      %p201 = scmp.ne.s32.totalorder %s184, %s200
      %p202 = scmp.eq.s32.totalorder %s24, 0
      %p203 = por %p201, %p202
      %p204 = scmp.le.s32.totalorder 1, %s18
      %p205 = scmp.lt.s32.totalorder %s18, 3
      %p206 = pnand %p204, %p205
      %p207 = pneg %p206
      // Predicated region
      $region9: #{tpu_custom_call.1} parent=5 // pred_check
        _
      $region10: #{tpu_custom_call.1} parent=5 // pred_check_branch
        %209 = sbr.rel (%p206) target = $region12
      $region11: #{tpu_custom_call.1} parent=5 // pred_region
        %s210 = ssub.s32 %s18, 1
      $region12: #{tpu_custom_call.1} parent=5 // pred_fallthru
        _
      %p211 = scmp.lt.s32.totalorder %s18, 2
      // Predicated region
      $region13: #{tpu_custom_call.1} parent=5 // pred_check
        %p212 = pneg %p211
      $region14: #{tpu_custom_call.1} parent=5 // pred_check_branch
        %214 = sbr.rel (%p212) target = $region16
      $region15: #{tpu_custom_call.1} parent=5 // pred_region
        // Predicated region
        $region17: #{tpu_custom_call.1} parent=15 // pred_check
          %p215 = pneg %p50
        $region18: #{tpu_custom_call.1} parent=15 // pred_check_branch
          %217 = sbr.rel (%p215) target = $region20
        $region19: #{tpu_custom_call.1} parent=15 // pred_region
          %p218 = scmp.lt.s32.totalorder %s25, 1
          %s219 = scalar_select %p218, %s25, 1
          %s220 = smul.addr %s219, 4
          %s221 = scalar_lea.vmem %s0, %s220
        $region20: #{tpu_custom_call.1} parent=15 // pred_fallthru
          _
        // Predicated region
        $region21: #{tpu_custom_call.1} parent=15 // pred_check
          %p222 = pneg %p78
        $region22: #{tpu_custom_call.1} parent=15 // pred_check_branch
          %224 = sbr.rel (%p222) target = $region24
        $region23: #{tpu_custom_call.1} parent=15 // pred_region
          %p225 = scmp.lt.s32.totalorder %s25, 1
          %s226 = scalar_select %p225, %s25, 1
          %p227 = scmp.lt.s32.totalorder %s26, 0
          %s228 = scalar_select %p227, %s26, 0
          %s229 = sadd.s32 %s228, %s226
          %s230 = smul.addr %s229, 4
          %s231 = scalar_lea.vmem %s1, %s230
        $region24: #{tpu_custom_call.1} parent=15 // pred_fallthru
          _
        // Predicated region
        $region25: #{tpu_custom_call.1} parent=15 // pred_check
          %p232 = pneg %p106
        $region26: #{tpu_custom_call.1} parent=15 // pred_check_branch
          %234 = sbr.rel (%p232) target = $region28
        $region27: #{tpu_custom_call.1} parent=15 // pred_region
          %p235 = scmp.lt.s32.totalorder %s25, 1
          %s236 = scalar_select %p235, %s25, 1
          %p237 = scmp.lt.s32.totalorder %s26, 0
          %s238 = scalar_select %p237, %s26, 0
          %s239 = sadd.s32 %s238, %s236
          %s240 = smul.addr %s239, 8
          %s241 = scalar_lea.vmem %s2, %s240
        $region28: #{tpu_custom_call.1} parent=15 // pred_fallthru
          _
      $region16: #{tpu_custom_call.1} parent=5 // pred_fallthru
        _
      %p242 = scmp.le.s32.totalorder 1, %s18
      %p243 = scmp.lt.s32.totalorder %s18, 3
      %p244 = pnand %p242, %p243
      %p245 = pneg %p244
      // Predicated region
      $region29: #{tpu_custom_call.1} parent=5 // pred_check
        _
      $region30: #{tpu_custom_call.1} parent=5 // pred_check_branch
        %247 = sbr.rel (%p244) target = $region32
      $region31: #{tpu_custom_call.1} parent=5 // pred_region
        %s248 = ssub.s32 %s18, 1
        %p249 = scmp.lt.s32.totalorder %s27, 1
        %s250 = scalar_select %p249, %s27, 1
        %s251 = smul.addr %s250, 4
        %s252 = scalar_lea.vmem %s0, %s251
        %p253 = pneg %p56
        %p254 = pneg %p53
        %p255 = scmp.lt.s32.totalorder %s27, 1
        %s256 = scalar_select %p255, %s27, 1
        %p257 = scmp.lt.s32.totalorder %s28, 0
        %s258 = scalar_select %p257, %s28, 0
        %s259 = sadd.s32 %s258, %s256
        %s260 = smul.addr %s259, 4
        %s261 = scalar_lea.vmem %s1, %s260
        %p262 = pneg %p84
        %p263 = pneg %p81
        %p264 = scmp.lt.s32.totalorder %s27, 1
        %s265 = scalar_select %p264, %s27, 1
        %p266 = scmp.lt.s32.totalorder %s28, 0
        %s267 = scalar_select %p266, %s28, 0
        %s268 = sadd.s32 %s267, %s265
        %s269 = smul.addr %s268, 8
        %s270 = scalar_lea.vmem %s2, %s269
        %p271 = pneg %p112
        %p272 = pneg %p109
        %p273 = pneg %p140
        %p274 = pneg %p137
        %s275 = sand.u32 %s127, 1
        %s276 = scalar_lea.sflag [#allocation3], %s275
        %s277 = sand.u32 %s127, 1
        %s278 = smul.addr %s277, 72
        %s279 = scalar_lea.vmem [#allocation2], %s278
        %p280 = pneg %p168
        %p281 = pneg %p165
        %s282 = sand.u32 %s23, 1
        %s283 = scalar_lea.sflag [#allocation5], %s282
        %s284 = sand.u32 %s155, 1
        %s285 = smul.addr %s284, 8
        %s286 = scalar_lea.vmem [#allocation4], %s285
        %p287 = pneg %p196
        %p288 = pneg %p193
        %s289 = sand.u32 %s23, 1
        %s290 = scalar_lea.sflag [#allocation5], %s289
        %s291 = sand.u32 %s183, 1
        %s292 = scalar_lea.vmem [#allocation6], %s291
        %p293 = scmp.lt.s32.totalorder %s27, 1
        %s294 = scalar_select %p293, %s27, 1
        %s295 = smul.addr %s294, 4
        %s296 = scalar_lea.vmem %s0, %s295
        %p297 = scmp.lt.s32.totalorder %s27, 1
        %s298 = scalar_select %p297, %s27, 1
        %p299 = scmp.lt.s32.totalorder %s28, 0
        %s300 = scalar_select %p299, %s28, 0
        %s301 = sadd.s32 %s300, %s298
        %s302 = smul.addr %s301, 4
        %s303 = scalar_lea.vmem %s1, %s302
        %p304 = scmp.lt.s32.totalorder %s27, 1
        %s305 = scalar_select %p304, %s27, 1
        %p306 = scmp.lt.s32.totalorder %s28, 0
        %s307 = scalar_select %p306, %s28, 0
        %s308 = sadd.s32 %s307, %s305
        %s309 = smul.addr %s308, 8
        %s310 = scalar_lea.vmem %s2, %s309
        %v311 = vld [vmem:[%s296] sm:$0x7]
        %v312 = vld [vmem:[%s303] sm:$0x7]
        %v313 = vld [vmem:[%s310] sm:$0xff]
        %v314 = vlaneseq
        %v315 = vshrl.u32 %v314, 7
        %v316 = vadd.s32 %v315, 8
        %v317 = vlaneseq
        %v318 = vshrl.u32 %v317, 7
        %v319 = vsub.s32 0, %v318
        %v320 = vrot.slane %v313, %v319
        %vm321 = vcmp.eq.s32.totalorder %v320, %v315
        %vm322 = vcmp.eq.s32.totalorder %v320, %v316
        %v323 = vsel %vm321, 1, 0
        %v324 = vsel %vm322, 1, 0
        %v325 = vcvt.s32.f32 %v323
        %v326 = vcvt.s32.f32 %v324
        %vm327 = vcmask 130048
        %v329 = vsel %vm327, %v311, 0
        %331 = vmatprep.subr.mxu0 0.0
        %332 = vmatpush1.msra.mxu0 0.0
        %333 = vmatprep.subr.mxu0 0.0
        %334 = vmatpush1.msra.mxu0 0.0
        %335 = vmatprep.subr.mxu0 0.0
        %336 = vmatpush1.msra.mxu0 0.0
        %337 = vmatprep.subr.mxu0 0.0
        %338 = vmatpush1.msra.mxu0 0.0
        %339 = vmatprep.subr.mxu0 0.0
        %340 = vmatpush1.msra.mxu0 0.0
        %341 = vmatprep.subr.mxu0 0.0
        %342 = vmatpush1.msra.mxu0 0.0
        %343 = vmatprep.subr.mxu0 0.0
        %344 = vmatpush1.msra.mxu0 0.0
        %345 = vmatprep.subr.mxu0 0.0
        %346 = vmatpush1.msra.mxu0 0.0
        %347 = vmatprep.subr.mxu0 0.0
        %348 = vmatpush1.msra.mxu0 0.0
        %349 = vmatprep.subr.mxu0 0.0
        %350 = vmatpush1.msra.mxu0 0.0
        %351 = vmatprep.subr.mxu0 0.0
        %352 = vmatpush1.msra.mxu0 0.0
        %353 = vmatprep.subr.mxu0 0.0
        %354 = vmatpush1.msra.mxu0 0.0
        %355 = vmatprep.subr.mxu0 0.0
        %356 = vmatpush1.msra.mxu0 0.0
        %357 = vmatprep.subr.mxu0 0.0
        %358 = vmatpush1.msra.mxu0 0.0
        %359 = vmatprep.subr.mxu0 0.0
        %360 = vmatpush1.msra.mxu0 %v326
        %361 = vmatprep.subr.mxu0 0.0
        %362 = vmatpush1.msra.mxu0 %v325
        %363 = vmatprep.subr.mxu0 0.0
        %364 = vmatpush2.msra.mxu0 0.0
        %365 = vmatprep.subr.mxu0 0.0
        %366 = vmatpush2.msra.mxu0 0.0
        %367 = vmatprep.subr.mxu0 0.0
        %368 = vmatpush2.msra.mxu0 0.0
        %369 = vmatprep.subr.mxu0 0.0
        %370 = vmatpush2.msra.mxu0 0.0
        %371 = vmatprep.subr.mxu0 0.0
        %372 = vmatpush2.msra.mxu0 0.0
        %373 = vmatprep.subr.mxu0 0.0
        %374 = vmatpush2.msra.mxu0 0.0
        %375 = vmatprep.subr.mxu0 0.0
        %376 = vmatpush2.msra.mxu0 0.0
        %377 = vmatprep.subr.mxu0 0.0
        %378 = vmatpush2.msra.mxu0 0.0
        %379 = vmatprep.subr.mxu0 0.0
        %380 = vmatpush2.msra.mxu0 0.0
        %381 = vmatprep.subr.mxu0 0.0
        %382 = vmatpush2.msra.mxu0 0.0
        %383 = vmatprep.subr.mxu0 0.0
        %384 = vmatpush2.msra.mxu0 0.0
        %385 = vmatprep.subr.mxu0 0.0
        %386 = vmatpush2.msra.mxu0 0.0
        %387 = vmatprep.subr.mxu0 0.0
        %388 = vmatpush2.msra.mxu0 0.0
        %389 = vmatprep.subr.mxu0 0.0
        %390 = vmatpush2.msra.mxu0 0.0
        %391 = vmatprep.subr.mxu0 0.0
        %392 = vmatpush2.msra.mxu0 0.0
        %393 = vmatprep.subr.mxu0 0.0
        %394 = vmatpush2.msra.mxu0 0.0
        %395 = vmatprep.mubr.f32.mxu0 0.0
        %396 = vmatmul.mubr.f32.gmra.mxu0 %v329
        %v397 = vpop.f32.mrf.mxu0
        %v398 = vadd.f32 0.0, %v397
        %v399 = vpop.f32.mrf.mxu0
        %400 = vdwg.mxu0
        %v401 = vlaneseq
        %v402 = vshrl.u32 %v401, 7
        %v403 = vsub.s32 1, %v402
        %v404 = vrot.slane %v313, %v403
        %vm405 = vcmp.eq.s32.totalorder %v404, %v315
        %vm406 = vcmp.eq.s32.totalorder %v404, %v316
        %v407 = vsel %vm405, 1, 0
        %v408 = vsel %vm406, 1, 0
        %v409 = vcvt.s32.f32 %v407
        %v410 = vcvt.s32.f32 %v408
        %411 = vmatprep.subr.mxu0 0.0
        %412 = vmatpush1.msra.mxu0 0.0
        %413 = vmatprep.subr.mxu0 0.0
        %414 = vmatpush1.msra.mxu0 0.0
        %415 = vmatprep.subr.mxu0 0.0
        %416 = vmatpush1.msra.mxu0 0.0
        %417 = vmatprep.subr.mxu0 0.0
        %418 = vmatpush1.msra.mxu0 0.0
        %419 = vmatprep.subr.mxu0 0.0
        %420 = vmatpush1.msra.mxu0 0.0
        %421 = vmatprep.subr.mxu0 0.0
        %422 = vmatpush1.msra.mxu0 0.0
        %423 = vmatprep.subr.mxu0 0.0
        %424 = vmatpush1.msra.mxu0 0.0
        %425 = vmatprep.subr.mxu0 0.0
        %426 = vmatpush1.msra.mxu0 0.0
        %427 = vmatprep.subr.mxu0 0.0
        %428 = vmatpush1.msra.mxu0 0.0
        %429 = vmatprep.subr.mxu0 0.0
        %430 = vmatpush1.msra.mxu0 0.0
        %431 = vmatprep.subr.mxu0 0.0
        %432 = vmatpush1.msra.mxu0 0.0
        %433 = vmatprep.subr.mxu0 0.0
        %434 = vmatpush1.msra.mxu0 0.0
        %435 = vmatprep.subr.mxu0 0.0
        %436 = vmatpush1.msra.mxu0 0.0
        %437 = vmatprep.subr.mxu0 0.0
        %438 = vmatpush1.msra.mxu0 0.0
        %439 = vmatprep.subr.mxu0 0.0
        %440 = vmatpush1.msra.mxu0 %v410
        %441 = vmatprep.subr.mxu0 0.0
        %442 = vmatpush1.msra.mxu0 %v409
        %443 = vmatprep.subr.mxu0 0.0
        %444 = vmatpush2.msra.mxu0 0.0
        %445 = vmatprep.subr.mxu0 0.0
        %446 = vmatpush2.msra.mxu0 0.0
        %447 = vmatprep.subr.mxu0 0.0
        %448 = vmatpush2.msra.mxu0 0.0
        %449 = vmatprep.subr.mxu0 0.0
        %450 = vmatpush2.msra.mxu0 0.0
        %451 = vmatprep.subr.mxu0 0.0
        %452 = vmatpush2.msra.mxu0 0.0
        %453 = vmatprep.subr.mxu0 0.0
        %454 = vmatpush2.msra.mxu0 0.0
        %455 = vmatprep.subr.mxu0 0.0
        %456 = vmatpush2.msra.mxu0 0.0
        %457 = vmatprep.subr.mxu0 0.0
        %458 = vmatpush2.msra.mxu0 0.0
        %459 = vmatprep.subr.mxu0 0.0
        %460 = vmatpush2.msra.mxu0 0.0
        %461 = vmatprep.subr.mxu0 0.0
        %462 = vmatpush2.msra.mxu0 0.0
        %463 = vmatprep.subr.mxu0 0.0
        %464 = vmatpush2.msra.mxu0 0.0
        %465 = vmatprep.subr.mxu0 0.0
        %466 = vmatpush2.msra.mxu0 0.0
        %467 = vmatprep.subr.mxu0 0.0
        %468 = vmatpush2.msra.mxu0 0.0
        %469 = vmatprep.subr.mxu0 0.0
        %470 = vmatpush2.msra.mxu0 0.0
        %471 = vmatprep.subr.mxu0 0.0
        %472 = vmatpush2.msra.mxu0 0.0
        %473 = vmatprep.subr.mxu0 0.0
        %474 = vmatpush2.msra.mxu0 0.0
        %475 = vmatprep.mubr.f32.mxu0 0.0
        %476 = vmatmul.mubr.f32.gmra.mxu0 %v329
        %v477 = vpop.f32.mrf.mxu0
        %v478 = vadd.f32 0.0, %v477
        %v479 = vpop.f32.mrf.mxu0
        %480 = vdwg.mxu0
        %v481 = vlaneseq
        %v482 = vshrl.u32 %v481, 7
        %v483 = vsub.s32 2, %v482
        %v484 = vrot.slane %v313, %v483
        %vm485 = vcmp.eq.s32.totalorder %v484, %v315
        %vm486 = vcmp.eq.s32.totalorder %v484, %v316
        %v487 = vsel %vm485, 1, 0
        %v488 = vsel %vm486, 1, 0
        %v489 = vcvt.s32.f32 %v487
        %v490 = vcvt.s32.f32 %v488
        %491 = vmatprep.subr.mxu0 0.0
        %492 = vmatpush1.msra.mxu0 0.0
        %493 = vmatprep.subr.mxu0 0.0
        %494 = vmatpush1.msra.mxu0 0.0
        %495 = vmatprep.subr.mxu0 0.0
        %496 = vmatpush1.msra.mxu0 0.0
        %497 = vmatprep.subr.mxu0 0.0
        %498 = vmatpush1.msra.mxu0 0.0
        %499 = vmatprep.subr.mxu0 0.0
        %500 = vmatpush1.msra.mxu0 0.0
        %501 = vmatprep.subr.mxu0 0.0
        %502 = vmatpush1.msra.mxu0 0.0
        %503 = vmatprep.subr.mxu0 0.0
        %504 = vmatpush1.msra.mxu0 0.0
        %505 = vmatprep.subr.mxu0 0.0
        %506 = vmatpush1.msra.mxu0 0.0
        %507 = vmatprep.subr.mxu0 0.0
        %508 = vmatpush1.msra.mxu0 0.0
        %509 = vmatprep.subr.mxu0 0.0
        %510 = vmatpush1.msra.mxu0 0.0
        %511 = vmatprep.subr.mxu0 0.0
        %512 = vmatpush1.msra.mxu0 0.0
        %513 = vmatprep.subr.mxu0 0.0
        %514 = vmatpush1.msra.mxu0 0.0
        %515 = vmatprep.subr.mxu0 0.0
        %516 = vmatpush1.msra.mxu0 0.0
        %517 = vmatprep.subr.mxu0 0.0
        %518 = vmatpush1.msra.mxu0 0.0
        %519 = vmatprep.subr.mxu0 0.0
        %520 = vmatpush1.msra.mxu0 %v490
        %521 = vmatprep.subr.mxu0 0.0
        %522 = vmatpush1.msra.mxu0 %v489
        %523 = vmatprep.subr.mxu0 0.0
        %524 = vmatpush2.msra.mxu0 0.0
        %525 = vmatprep.subr.mxu0 0.0
        %526 = vmatpush2.msra.mxu0 0.0
        %527 = vmatprep.subr.mxu0 0.0
        %528 = vmatpush2.msra.mxu0 0.0
        %529 = vmatprep.subr.mxu0 0.0
        %530 = vmatpush2.msra.mxu0 0.0
        %531 = vmatprep.subr.mxu0 0.0
        %532 = vmatpush2.msra.mxu0 0.0
        %533 = vmatprep.subr.mxu0 0.0
        %534 = vmatpush2.msra.mxu0 0.0
        %535 = vmatprep.subr.mxu0 0.0
        %536 = vmatpush2.msra.mxu0 0.0
        %537 = vmatprep.subr.mxu0 0.0
        %538 = vmatpush2.msra.mxu0 0.0
        %539 = vmatprep.subr.mxu0 0.0
        %540 = vmatpush2.msra.mxu0 0.0
        %541 = vmatprep.subr.mxu0 0.0
        %542 = vmatpush2.msra.mxu0 0.0
        %543 = vmatprep.subr.mxu0 0.0
        %544 = vmatpush2.msra.mxu0 0.0
        %545 = vmatprep.subr.mxu0 0.0
        %546 = vmatpush2.msra.mxu0 0.0
        %547 = vmatprep.subr.mxu0 0.0
        %548 = vmatpush2.msra.mxu0 0.0
        %549 = vmatprep.subr.mxu0 0.0
        %550 = vmatpush2.msra.mxu0 0.0
        %551 = vmatprep.subr.mxu0 0.0
        %552 = vmatpush2.msra.mxu0 0.0
        %553 = vmatprep.subr.mxu0 0.0
        %554 = vmatpush2.msra.mxu0 0.0
        %555 = vmatprep.mubr.f32.mxu0 0.0
        %556 = vmatmul.mubr.f32.gmra.mxu0 %v329
        %v557 = vpop.f32.mrf.mxu0
        %v558 = vadd.f32 0.0, %v557
        %v559 = vpop.f32.mrf.mxu0
        %560 = vdwg.mxu0
        %v561 = vlaneseq
        %v562 = vshrl.u32 %v561, 7
        %v563 = vsub.s32 3, %v562
        %v564 = vrot.slane %v313, %v563
        %vm565 = vcmp.eq.s32.totalorder %v564, %v315
        %vm566 = vcmp.eq.s32.totalorder %v564, %v316
        %v567 = vsel %vm565, 1, 0
        %v568 = vsel %vm566, 1, 0
        %v569 = vcvt.s32.f32 %v567
        %v570 = vcvt.s32.f32 %v568
        %571 = vmatprep.subr.mxu0 0.0
        %572 = vmatpush1.msra.mxu0 0.0
        %573 = vmatprep.subr.mxu0 0.0
        %574 = vmatpush1.msra.mxu0 0.0
        %575 = vmatprep.subr.mxu0 0.0
        %576 = vmatpush1.msra.mxu0 0.0
        %577 = vmatprep.subr.mxu0 0.0
        %578 = vmatpush1.msra.mxu0 0.0
        %579 = vmatprep.subr.mxu0 0.0
        %580 = vmatpush1.msra.mxu0 0.0
        %581 = vmatprep.subr.mxu0 0.0
        %582 = vmatpush1.msra.mxu0 0.0
        %583 = vmatprep.subr.mxu0 0.0
        %584 = vmatpush1.msra.mxu0 0.0
        %585 = vmatprep.subr.mxu0 0.0
        %586 = vmatpush1.msra.mxu0 0.0
        %587 = vmatprep.subr.mxu0 0.0
        %588 = vmatpush1.msra.mxu0 0.0
        %589 = vmatprep.subr.mxu0 0.0
        %590 = vmatpush1.msra.mxu0 0.0
        %591 = vmatprep.subr.mxu0 0.0
        %592 = vmatpush1.msra.mxu0 0.0
        %593 = vmatprep.subr.mxu0 0.0
        %594 = vmatpush1.msra.mxu0 0.0
        %595 = vmatprep.subr.mxu0 0.0
        %596 = vmatpush1.msra.mxu0 0.0
        %597 = vmatprep.subr.mxu0 0.0
        %598 = vmatpush1.msra.mxu0 0.0
        %599 = vmatprep.subr.mxu0 0.0
        %600 = vmatpush1.msra.mxu0 %v570
        %601 = vmatprep.subr.mxu0 0.0
        %602 = vmatpush1.msra.mxu0 %v569
        %603 = vmatprep.subr.mxu0 0.0
        %604 = vmatpush2.msra.mxu0 0.0
        %605 = vmatprep.subr.mxu0 0.0
        %606 = vmatpush2.msra.mxu0 0.0
        %607 = vmatprep.subr.mxu0 0.0
        %608 = vmatpush2.msra.mxu0 0.0
        %609 = vmatprep.subr.mxu0 0.0
        %610 = vmatpush2.msra.mxu0 0.0
        %611 = vmatprep.subr.mxu0 0.0
        %612 = vmatpush2.msra.mxu0 0.0
        %613 = vmatprep.subr.mxu0 0.0
        %614 = vmatpush2.msra.mxu0 0.0
        %615 = vmatprep.subr.mxu0 0.0
        %616 = vmatpush2.msra.mxu0 0.0
        %617 = vmatprep.subr.mxu0 0.0
        %618 = vmatpush2.msra.mxu0 0.0
        %619 = vmatprep.subr.mxu0 0.0
        %620 = vmatpush2.msra.mxu0 0.0
        %621 = vmatprep.subr.mxu0 0.0
        %622 = vmatpush2.msra.mxu0 0.0
        %623 = vmatprep.subr.mxu0 0.0
        %624 = vmatpush2.msra.mxu0 0.0
        %625 = vmatprep.subr.mxu0 0.0
        %626 = vmatpush2.msra.mxu0 0.0
        %627 = vmatprep.subr.mxu0 0.0
        %628 = vmatpush2.msra.mxu0 0.0
        %629 = vmatprep.subr.mxu0 0.0
        %630 = vmatpush2.msra.mxu0 0.0
        %631 = vmatprep.subr.mxu0 0.0
        %632 = vmatpush2.msra.mxu0 0.0
        %633 = vmatprep.subr.mxu0 0.0
        %634 = vmatpush2.msra.mxu0 0.0
        %635 = vmatprep.mubr.f32.mxu0 0.0
        %636 = vmatmul.mubr.f32.gmra.mxu0 %v329
        %v637 = vpop.f32.mrf.mxu0
        %v638 = vadd.f32 0.0, %v637
        %v639 = vpop.f32.mrf.mxu0
        %640 = vdwg.mxu0
        %v641 = vlaneseq
        %v642 = vshrl.u32 %v641, 7
        %v643 = vsub.s32 4, %v642
        %v644 = vrot.slane %v313, %v643
        %vm645 = vcmp.eq.s32.totalorder %v644, %v315
        %vm646 = vcmp.eq.s32.totalorder %v644, %v316
        %v647 = vsel %vm645, 1, 0
        %v648 = vsel %vm646, 1, 0
        %v649 = vcvt.s32.f32 %v647
        %v650 = vcvt.s32.f32 %v648
        %651 = vmatprep.subr.mxu0 0.0
        %652 = vmatpush1.msra.mxu0 0.0
        %653 = vmatprep.subr.mxu0 0.0
        %654 = vmatpush1.msra.mxu0 0.0
        %655 = vmatprep.subr.mxu0 0.0
        %656 = vmatpush1.msra.mxu0 0.0
        %657 = vmatprep.subr.mxu0 0.0
        %658 = vmatpush1.msra.mxu0 0.0
        %659 = vmatprep.subr.mxu0 0.0
        %660 = vmatpush1.msra.mxu0 0.0
        %661 = vmatprep.subr.mxu0 0.0
        %662 = vmatpush1.msra.mxu0 0.0
        %663 = vmatprep.subr.mxu0 0.0
        %664 = vmatpush1.msra.mxu0 0.0
        %665 = vmatprep.subr.mxu0 0.0
        %666 = vmatpush1.msra.mxu0 0.0
        %667 = vmatprep.subr.mxu0 0.0
        %668 = vmatpush1.msra.mxu0 0.0
        %669 = vmatprep.subr.mxu0 0.0
        %670 = vmatpush1.msra.mxu0 0.0
        %671 = vmatprep.subr.mxu0 0.0
        %672 = vmatpush1.msra.mxu0 0.0
        %673 = vmatprep.subr.mxu0 0.0
        %674 = vmatpush1.msra.mxu0 0.0
        %675 = vmatprep.subr.mxu0 0.0
        %676 = vmatpush1.msra.mxu0 0.0
        %677 = vmatprep.subr.mxu0 0.0
        %678 = vmatpush1.msra.mxu0 0.0
        %679 = vmatprep.subr.mxu0 0.0
        %680 = vmatpush1.msra.mxu0 %v650
        %681 = vmatprep.subr.mxu0 0.0
        %682 = vmatpush1.msra.mxu0 %v649
        %683 = vmatprep.subr.mxu0 0.0
        %684 = vmatpush2.msra.mxu0 0.0
        %685 = vmatprep.subr.mxu0 0.0
        %686 = vmatpush2.msra.mxu0 0.0
        %687 = vmatprep.subr.mxu0 0.0
        %688 = vmatpush2.msra.mxu0 0.0
        %689 = vmatprep.subr.mxu0 0.0
        %690 = vmatpush2.msra.mxu0 0.0
        %691 = vmatprep.subr.mxu0 0.0
        %692 = vmatpush2.msra.mxu0 0.0
        %693 = vmatprep.subr.mxu0 0.0
        %694 = vmatpush2.msra.mxu0 0.0
        %695 = vmatprep.subr.mxu0 0.0
        %696 = vmatpush2.msra.mxu0 0.0
        %697 = vmatprep.subr.mxu0 0.0
        %698 = vmatpush2.msra.mxu0 0.0
        %699 = vmatprep.subr.mxu0 0.0
        %700 = vmatpush2.msra.mxu0 0.0
        %701 = vmatprep.subr.mxu0 0.0
        %702 = vmatpush2.msra.mxu0 0.0
        %703 = vmatprep.subr.mxu0 0.0
        %704 = vmatpush2.msra.mxu0 0.0
        %705 = vmatprep.subr.mxu0 0.0
        %706 = vmatpush2.msra.mxu0 0.0
        %707 = vmatprep.subr.mxu0 0.0
        %708 = vmatpush2.msra.mxu0 0.0
        %709 = vmatprep.subr.mxu0 0.0
        %710 = vmatpush2.msra.mxu0 0.0
        %711 = vmatprep.subr.mxu0 0.0
        %712 = vmatpush2.msra.mxu0 0.0
        %713 = vmatprep.subr.mxu0 0.0
        %714 = vmatpush2.msra.mxu0 0.0
        %715 = vmatprep.mubr.f32.mxu0 0.0
        %716 = vmatmul.mubr.f32.gmra.mxu0 %v329
        %v717 = vpop.f32.mrf.mxu0
        %v718 = vadd.f32 0.0, %v717
        %v719 = vpop.f32.mrf.mxu0
        %720 = vdwg.mxu0
        %v721 = vlaneseq
        %v722 = vshrl.u32 %v721, 7
        %v723 = vsub.s32 5, %v722
        %v724 = vrot.slane %v313, %v723
        %vm725 = vcmp.eq.s32.totalorder %v724, %v315
        %vm726 = vcmp.eq.s32.totalorder %v724, %v316
        %v727 = vsel %vm725, 1, 0
        %v728 = vsel %vm726, 1, 0
        %v729 = vcvt.s32.f32 %v727
        %v730 = vcvt.s32.f32 %v728
        %731 = vmatprep.subr.mxu0 0.0
        %732 = vmatpush1.msra.mxu0 0.0
        %733 = vmatprep.subr.mxu0 0.0
        %734 = vmatpush1.msra.mxu0 0.0
        %735 = vmatprep.subr.mxu0 0.0
        %736 = vmatpush1.msra.mxu0 0.0
        %737 = vmatprep.subr.mxu0 0.0
        %738 = vmatpush1.msra.mxu0 0.0
        %739 = vmatprep.subr.mxu0 0.0
        %740 = vmatpush1.msra.mxu0 0.0
        %741 = vmatprep.subr.mxu0 0.0
        %742 = vmatpush1.msra.mxu0 0.0
        %743 = vmatprep.subr.mxu0 0.0
        %744 = vmatpush1.msra.mxu0 0.0
        %745 = vmatprep.subr.mxu0 0.0
        %746 = vmatpush1.msra.mxu0 0.0
        %747 = vmatprep.subr.mxu0 0.0
        %748 = vmatpush1.msra.mxu0 0.0
        %749 = vmatprep.subr.mxu0 0.0
        %750 = vmatpush1.msra.mxu0 0.0
        %751 = vmatprep.subr.mxu0 0.0
        %752 = vmatpush1.msra.mxu0 0.0
        %753 = vmatprep.subr.mxu0 0.0
        %754 = vmatpush1.msra.mxu0 0.0
        %755 = vmatprep.subr.mxu0 0.0
        %756 = vmatpush1.msra.mxu0 0.0
        %757 = vmatprep.subr.mxu0 0.0
        %758 = vmatpush1.msra.mxu0 0.0
        %759 = vmatprep.subr.mxu0 0.0
        %760 = vmatpush1.msra.mxu0 %v730
        %761 = vmatprep.subr.mxu0 0.0
        %762 = vmatpush1.msra.mxu0 %v729
        %763 = vmatprep.subr.mxu0 0.0
        %764 = vmatpush2.msra.mxu0 0.0
        %765 = vmatprep.subr.mxu0 0.0
        %766 = vmatpush2.msra.mxu0 0.0
        %767 = vmatprep.subr.mxu0 0.0
        %768 = vmatpush2.msra.mxu0 0.0
        %769 = vmatprep.subr.mxu0 0.0
        %770 = vmatpush2.msra.mxu0 0.0
        %771 = vmatprep.subr.mxu0 0.0
        %772 = vmatpush2.msra.mxu0 0.0
        %773 = vmatprep.subr.mxu0 0.0
        %774 = vmatpush2.msra.mxu0 0.0
        %775 = vmatprep.subr.mxu0 0.0
        %776 = vmatpush2.msra.mxu0 0.0
        %777 = vmatprep.subr.mxu0 0.0
        %778 = vmatpush2.msra.mxu0 0.0
        %779 = vmatprep.subr.mxu0 0.0
        %780 = vmatpush2.msra.mxu0 0.0
        %781 = vmatprep.subr.mxu0 0.0
        %782 = vmatpush2.msra.mxu0 0.0
        %783 = vmatprep.subr.mxu0 0.0
        %784 = vmatpush2.msra.mxu0 0.0
        %785 = vmatprep.subr.mxu0 0.0
        %786 = vmatpush2.msra.mxu0 0.0
        %787 = vmatprep.subr.mxu0 0.0
        %788 = vmatpush2.msra.mxu0 0.0
        %789 = vmatprep.subr.mxu0 0.0
        %790 = vmatpush2.msra.mxu0 0.0
        %791 = vmatprep.subr.mxu0 0.0
        %792 = vmatpush2.msra.mxu0 0.0
        %793 = vmatprep.subr.mxu0 0.0
        %794 = vmatpush2.msra.mxu0 0.0
        %795 = vmatprep.mubr.f32.mxu0 0.0
        %796 = vmatmul.mubr.f32.gmra.mxu0 %v329
        %v797 = vpop.f32.mrf.mxu0
        %v798 = vadd.f32 0.0, %v797
        %v799 = vpop.f32.mrf.mxu0
        %800 = vdwg.mxu0
        %v801 = vlaneseq
        %v802 = vshrl.u32 %v801, 7
        %v803 = vsub.s32 6, %v802
        %v804 = vrot.slane %v313, %v803
        %vm805 = vcmp.eq.s32.totalorder %v804, %v315
        %vm806 = vcmp.eq.s32.totalorder %v804, %v316
        %v807 = vsel %vm805, 1, 0
        %v808 = vsel %vm806, 1, 0
        %v809 = vcvt.s32.f32 %v807
        %v810 = vcvt.s32.f32 %v808
        %811 = vmatprep.subr.mxu0 0.0
        %812 = vmatpush1.msra.mxu0 0.0
        %813 = vmatprep.subr.mxu0 0.0
        %814 = vmatpush1.msra.mxu0 0.0
        %815 = vmatprep.subr.mxu0 0.0
        %816 = vmatpush1.msra.mxu0 0.0
        %817 = vmatprep.subr.mxu0 0.0
        %818 = vmatpush1.msra.mxu0 0.0
        %819 = vmatprep.subr.mxu0 0.0
        %820 = vmatpush1.msra.mxu0 0.0
        %821 = vmatprep.subr.mxu0 0.0
        %822 = vmatpush1.msra.mxu0 0.0
        %823 = vmatprep.subr.mxu0 0.0
        %824 = vmatpush1.msra.mxu0 0.0
        %825 = vmatprep.subr.mxu0 0.0
        %826 = vmatpush1.msra.mxu0 0.0
        %827 = vmatprep.subr.mxu0 0.0
        %828 = vmatpush1.msra.mxu0 0.0
        %829 = vmatprep.subr.mxu0 0.0
        %830 = vmatpush1.msra.mxu0 0.0
        %831 = vmatprep.subr.mxu0 0.0
        %832 = vmatpush1.msra.mxu0 0.0
        %833 = vmatprep.subr.mxu0 0.0
        %834 = vmatpush1.msra.mxu0 0.0
        %835 = vmatprep.subr.mxu0 0.0
        %836 = vmatpush1.msra.mxu0 0.0
        %837 = vmatprep.subr.mxu0 0.0
        %838 = vmatpush1.msra.mxu0 0.0
        %839 = vmatprep.subr.mxu0 0.0
        %840 = vmatpush1.msra.mxu0 %v810
        %841 = vmatprep.subr.mxu0 0.0
        %842 = vmatpush1.msra.mxu0 %v809
        %843 = vmatprep.subr.mxu0 0.0
        %844 = vmatpush2.msra.mxu0 0.0
        %845 = vmatprep.subr.mxu0 0.0
        %846 = vmatpush2.msra.mxu0 0.0
        %847 = vmatprep.subr.mxu0 0.0
        %848 = vmatpush2.msra.mxu0 0.0
        %849 = vmatprep.subr.mxu0 0.0
        %850 = vmatpush2.msra.mxu0 0.0
        %851 = vmatprep.subr.mxu0 0.0
        %852 = vmatpush2.msra.mxu0 0.0
        %853 = vmatprep.subr.mxu0 0.0
        %854 = vmatpush2.msra.mxu0 0.0
        %855 = vmatprep.subr.mxu0 0.0
        %856 = vmatpush2.msra.mxu0 0.0
        %857 = vmatprep.subr.mxu0 0.0
        %858 = vmatpush2.msra.mxu0 0.0
        %859 = vmatprep.subr.mxu0 0.0
        %860 = vmatpush2.msra.mxu0 0.0
        %861 = vmatprep.subr.mxu0 0.0
        %862 = vmatpush2.msra.mxu0 0.0
        %863 = vmatprep.subr.mxu0 0.0
        %864 = vmatpush2.msra.mxu0 0.0
        %865 = vmatprep.subr.mxu0 0.0
        %866 = vmatpush2.msra.mxu0 0.0
        %867 = vmatprep.subr.mxu0 0.0
        %868 = vmatpush2.msra.mxu0 0.0
        %869 = vmatprep.subr.mxu0 0.0
        %870 = vmatpush2.msra.mxu0 0.0
        %871 = vmatprep.subr.mxu0 0.0
        %872 = vmatpush2.msra.mxu0 0.0
        %873 = vmatprep.subr.mxu0 0.0
        %874 = vmatpush2.msra.mxu0 0.0
        %875 = vmatprep.mubr.f32.mxu0 0.0
        %876 = vmatmul.mubr.f32.gmra.mxu0 %v329
        %v877 = vpop.f32.mrf.mxu0
        %v878 = vadd.f32 0.0, %v877
        %v879 = vpop.f32.mrf.mxu0
        %880 = vdwg.mxu0
        %v881 = vlaneseq
        %v882 = vshrl.u32 %v881, 7
        %v883 = vsub.s32 7, %v882
        %v884 = vrot.slane %v313, %v883
        %vm885 = vcmp.eq.s32.totalorder %v884, %v315
        %vm886 = vcmp.eq.s32.totalorder %v884, %v316
        %v887 = vsel %vm885, 1, 0
        %v888 = vsel %vm886, 1, 0
        %v889 = vcvt.s32.f32 %v887
        %v890 = vcvt.s32.f32 %v888
        %891 = vmatprep.subr.mxu0 0.0
        %892 = vmatpush1.msra.mxu0 0.0
        %893 = vmatprep.subr.mxu0 0.0
        %894 = vmatpush1.msra.mxu0 0.0
        %895 = vmatprep.subr.mxu0 0.0
        %896 = vmatpush1.msra.mxu0 0.0
        %897 = vmatprep.subr.mxu0 0.0
        %898 = vmatpush1.msra.mxu0 0.0
        %899 = vmatprep.subr.mxu0 0.0
        %900 = vmatpush1.msra.mxu0 0.0
        %901 = vmatprep.subr.mxu0 0.0
        %902 = vmatpush1.msra.mxu0 0.0
        %903 = vmatprep.subr.mxu0 0.0
        %904 = vmatpush1.msra.mxu0 0.0
        %905 = vmatprep.subr.mxu0 0.0
        %906 = vmatpush1.msra.mxu0 0.0
        %907 = vmatprep.subr.mxu0 0.0
        %908 = vmatpush1.msra.mxu0 0.0
        %909 = vmatprep.subr.mxu0 0.0
        %910 = vmatpush1.msra.mxu0 0.0
        %911 = vmatprep.subr.mxu0 0.0
        %912 = vmatpush1.msra.mxu0 0.0
        %913 = vmatprep.subr.mxu0 0.0
        %914 = vmatpush1.msra.mxu0 0.0
        %915 = vmatprep.subr.mxu0 0.0
        %916 = vmatpush1.msra.mxu0 0.0
        %917 = vmatprep.subr.mxu0 0.0
        %918 = vmatpush1.msra.mxu0 0.0
        %919 = vmatprep.subr.mxu0 0.0
        %920 = vmatpush1.msra.mxu0 %v890
        %921 = vmatprep.subr.mxu0 0.0
        %922 = vmatpush1.msra.mxu0 %v889
        %923 = vmatprep.subr.mxu0 0.0
        %924 = vmatpush2.msra.mxu0 0.0
        %925 = vmatprep.subr.mxu0 0.0
        %926 = vmatpush2.msra.mxu0 0.0
        %927 = vmatprep.subr.mxu0 0.0
        %928 = vmatpush2.msra.mxu0 0.0
        %929 = vmatprep.subr.mxu0 0.0
        %930 = vmatpush2.msra.mxu0 0.0
        %931 = vmatprep.subr.mxu0 0.0
        %932 = vmatpush2.msra.mxu0 0.0
        %933 = vmatprep.subr.mxu0 0.0
        %934 = vmatpush2.msra.mxu0 0.0
        %935 = vmatprep.subr.mxu0 0.0
        %936 = vmatpush2.msra.mxu0 0.0
        %937 = vmatprep.subr.mxu0 0.0
        %938 = vmatpush2.msra.mxu0 0.0
        %939 = vmatprep.subr.mxu0 0.0
        %940 = vmatpush2.msra.mxu0 0.0
        %941 = vmatprep.subr.mxu0 0.0
        %942 = vmatpush2.msra.mxu0 0.0
        %943 = vmatprep.subr.mxu0 0.0
        %944 = vmatpush2.msra.mxu0 0.0
        %945 = vmatprep.subr.mxu0 0.0
        %946 = vmatpush2.msra.mxu0 0.0
        %947 = vmatprep.subr.mxu0 0.0
        %948 = vmatpush2.msra.mxu0 0.0
        %949 = vmatprep.subr.mxu0 0.0
        %950 = vmatpush2.msra.mxu0 0.0
        %951 = vmatprep.subr.mxu0 0.0
        %952 = vmatpush2.msra.mxu0 0.0
        %953 = vmatprep.subr.mxu0 0.0
        %954 = vmatpush2.msra.mxu0 0.0
        %955 = vmatprep.mubr.f32.mxu0 0.0
        %956 = vmatmul.mubr.f32.gmra.mxu0 %v329
        %v957 = vpop.f32.mrf.mxu0
        %v958 = vadd.f32 0.0, %v957
        %v959 = vpop.f32.mrf.mxu0
        %960 = vdwg.mxu0
        %v962 = vrot.slane %v478, 7
        %v965 = vrot.slane %v558, 6
        %v968 = vrot.slane %v638, 5
        %v971 = vrot.slane %v718, 4
        %v974 = vrot.slane %v798, 3
        %v977 = vrot.slane %v878, 2
        %v980 = vrot.slane %v958, 1
        %vm982 = vcmask 1040384
        %v983 = vsel %vm982, %v398, %v962
        %vm984 = vcmask 1041408
        %v985 = vsel %vm984, %v983, %v965
        %vm986 = vcmask 1042432
        %v987 = vsel %vm986, %v985, %v968
        %vm988 = vcmask 1043456
        %v989 = vsel %vm988, %v987, %v971
        %vm990 = vcmask 1044480
        %v991 = vsel %vm990, %v989, %v974
        %vm992 = vcmask 1045504
        %v993 = vsel %vm992, %v991, %v977
        %vm994 = vcmask 1046528
        %v995 = vsel %vm994, %v993, %v980
        %v997 = vrot.slane %v398, 1
        %v999 = vrot.slane %v558, 7
        %v1001 = vrot.slane %v638, 6
        %v1003 = vrot.slane %v718, 5
        %v1005 = vrot.slane %v798, 4
        %v1007 = vrot.slane %v878, 3
        %v1009 = vrot.slane %v958, 2
        %v1011 = vsel %vm982, %v997, %v478
        %v1012 = vsel %vm984, %v1011, %v999
        %v1013 = vsel %vm986, %v1012, %v1001
        %v1014 = vsel %vm988, %v1013, %v1003
        %v1015 = vsel %vm990, %v1014, %v1005
        %v1016 = vsel %vm992, %v1015, %v1007
        %v1017 = vsel %vm994, %v1016, %v1009
        %v1018 = vrot.slane %v398, 2
        %v1020 = vrot.slane %v478, 1
        %v1022 = vrot.slane %v638, 7
        %v1024 = vrot.slane %v718, 6
        %v1026 = vrot.slane %v798, 5
        %v1028 = vrot.slane %v878, 4
        %v1030 = vrot.slane %v958, 3
        %v1032 = vsel %vm982, %v1018, %v1020
        %v1033 = vsel %vm984, %v1032, %v558
        %v1034 = vsel %vm986, %v1033, %v1022
        %v1035 = vsel %vm988, %v1034, %v1024
        %v1036 = vsel %vm990, %v1035, %v1026
        %v1037 = vsel %vm992, %v1036, %v1028
        %v1038 = vsel %vm994, %v1037, %v1030
        %v1039 = vlaneseq
        %v1040 = vshrl.u32 %v1039, 7
        %v1041 = vsub.s32 0, %v1040
        %v1042 = vrot.slane %v312, %v1041
        %v1043 = vsub.f32 %v1042, %v995
        %v1044 = vlaneseq
        %v1045 = vshrl.u32 %v1044, 7
        %v1046 = vsub.s32 1, %v1045
        %v1047 = vrot.slane %v312, %v1046
        %v1048 = vsub.f32 %v1047, %v1017
        %v1049 = vlaneseq
        %v1050 = vshrl.u32 %v1049, 7
        %v1051 = vsub.s32 2, %v1050
        %v1052 = vrot.slane %v312, %v1051
        %v1053 = vsub.f32 %v1052, %v1038
        %v1054 = vmul.f32 %v1043, %v1043
        %v1055 = vmul.f32 %v1048, %v1048
        %v1056 = vmul.f32 %v1053, %v1053
        %vm1057 = vcmp.eq.f32.partialorder %v1043, 0.0
        %v1058 = vsel %vm1057, 1.0, %v1043
        %v1059 = vrcp.pop %v1058
        %v1060 = vmul.f32 %v1048, %v1059
        %v1061 = vand.u32 2147483647, %v1060
        %vm1062 = vcmp.gt.f32.partialorder %v1061, 2.4142137
        %vm1063 = vcmp.gt.f32.partialorder %v1061, 0.41421357
        %vm1064 = vmxor %vm1062, 1
        %vm1065 = vmand %vm1063, %vm1064
        %vm1066 = vcmp.eq.f32.partialorder %v1061, 0.0
        %v1067 = vsel %vm1066, 1.0, %v1061
        %v1068 = vrcp.pop %v1067
        %v1069 = vmul.f32 -1.0, %v1068
        %v1070 = vsub.f32 %v1061, 1.0
        %v1071 = vadd.f32 %v1061, 1.0
        %v1072 = vrcp.pop %v1071
        %v1073 = vmul.f32 %v1070, %v1072
        %v1074 = vsel %vm1065, %v1073, %v1061
        %v1075 = vsel %vm1062, %v1069, %v1074
        %v1076 = vsel %vm1065, 0.7853982, 0.0
        %v1077 = vsel %vm1062, 1.5707964, %v1076
        %v1078 = vmul.f32 %v1075, %v1075
        %v1079 = vmul.f32 %v1078, 0.080537446
        %v1080 = vsub.f32 %v1079, 0.13877685
        %v1081 = vmul.f32 %v1080, %v1078
        %v1082 = vadd.f32 %v1081, 0.19977711
        %v1083 = vmul.f32 %v1082, %v1078
        %v1084 = vsub.f32 %v1083, 0.3333295
        %v1085 = vmul.f32 %v1084, %v1078
        %v1086 = vmul.f32 %v1085, %v1075
        %v1087 = vadd.f32 %v1077, %v1086
        %v1088 = vadd.f32 %v1087, %v1075
        %vm1089 = vcmp.lt.f32.partialorder %v1060, 0.0
        %v1090 = vsub.f32 0.0, %v1088
        %v1091 = vsel %vm1089, %v1090, %v1088
        %vm1092 = vcmp.ge.f32.partialorder %v1048, 0.0
        %v1093 = vadd.f32 %v1091, 3.1415927
        %v1094 = vsub.f32 %v1091, 3.1415927
        %v1095 = vsel %vm1092, %v1093, %v1094
        %vm1096 = vcmp.gt.f32.partialorder %v1048, 0.0
        %vm1097 = vcmp.lt.f32.partialorder %v1048, 0.0
        %v1098 = vsel %vm1097, -1.5707964, 0.0
        %v1099 = vsel %vm1096, 1.5707964, %v1098
        %vm1100 = vcmp.gt.f32.partialorder %v1043, 0.0
        %vm1101 = vcmp.lt.f32.partialorder %v1043, 0.0
        %v1102 = vsel %vm1101, %v1095, %v1099
        %v1103 = vsel %vm1100, %v1091, %v1102
        %v1104 = vadd.f32 %v1054, %v1055
        %v1105 = vrsqrt.pop %v1104
        %v1106 = vmul.f32 %v1104, %v1105
        %vm1107 = vcmp.eq.f32.partialorder %v1104, inf
        %v1108 = vsel %vm1107, %v1104, %v1106
        %vm1109 = vcmp.eq.f32.partialorder %v1104, 0.0
        %v1110 = vand.u32 %v1104, 2147483648
        %v1111 = vsel %vm1109, %v1110, %v1108
        %vm1112 = vcmp.eq.f32.partialorder %v1111, 0.0
        %v1113 = vsel %vm1112, 1.0, %v1111
        %v1114 = vrcp.pop %v1113
        %v1115 = vmul.f32 %v1053, %v1114
        %v1116 = vand.u32 2147483647, %v1115
        %vm1117 = vcmp.gt.f32.partialorder %v1116, 2.4142137
        %vm1118 = vcmp.gt.f32.partialorder %v1116, 0.41421357
        %vm1119 = vmxor %vm1117, 1
        %vm1120 = vmand %vm1118, %vm1119
        %vm1121 = vcmp.eq.f32.partialorder %v1116, 0.0
        %v1122 = vsel %vm1121, 1.0, %v1116
        %v1123 = vrcp.pop %v1122
        %v1124 = vmul.f32 -1.0, %v1123
        %v1125 = vsub.f32 %v1116, 1.0
        %v1126 = vadd.f32 %v1116, 1.0
        %v1127 = vrcp.pop %v1126
        %v1128 = vmul.f32 %v1125, %v1127
        %v1129 = vsel %vm1120, %v1128, %v1116
        %v1130 = vsel %vm1117, %v1124, %v1129
        %v1131 = vsel %vm1120, 0.7853982, 0.0
        %v1132 = vsel %vm1117, 1.5707964, %v1131
        %v1133 = vmul.f32 %v1130, %v1130
        %v1134 = vmul.f32 %v1133, 0.080537446
        %v1135 = vsub.f32 %v1134, 0.13877685
        %v1136 = vmul.f32 %v1135, %v1133
        %v1137 = vadd.f32 %v1136, 0.19977711
        %v1138 = vmul.f32 %v1137, %v1133
        %v1139 = vsub.f32 %v1138, 0.3333295
        %v1140 = vmul.f32 %v1139, %v1133
        %v1141 = vmul.f32 %v1140, %v1130
        %v1142 = vadd.f32 %v1132, %v1141
        %v1143 = vadd.f32 %v1142, %v1130
        %vm1144 = vcmp.lt.f32.partialorder %v1115, 0.0
        %v1145 = vsub.f32 0.0, %v1143
        %v1146 = vsel %vm1144, %v1145, %v1143
        %vm1147 = vcmp.ge.f32.partialorder %v1053, 0.0
        %v1148 = vadd.f32 %v1146, 3.1415927
        %v1149 = vsub.f32 %v1146, 3.1415927
        %v1150 = vsel %vm1147, %v1148, %v1149
        %vm1151 = vcmp.gt.f32.partialorder %v1053, 0.0
        %vm1152 = vcmp.lt.f32.partialorder %v1053, 0.0
        %v1153 = vsel %vm1152, -1.5707964, 0.0
        %v1154 = vsel %vm1151, 1.5707964, %v1153
        %vm1155 = vcmp.gt.f32.partialorder %v1111, 0.0
        %vm1156 = vcmp.lt.f32.partialorder %v1111, 0.0
        %v1157 = vsel %vm1156, %v1150, %v1154
        %v1158 = vsel %vm1155, %v1146, %v1157
        %v1159 = vadd.f32 %v1104, %v1056
        %v1160 = vrsqrt.pop %v1159
        %v1161 = vmul.f32 %v1159, %v1160
        %vm1162 = vcmp.eq.f32.partialorder %v1159, inf
        %v1163 = vsel %vm1162, %v1159, %v1161
        %vm1164 = vcmp.eq.f32.partialorder %v1159, 0.0
        %v1165 = vand.u32 %v1159, 2147483648
        %v1166 = vsel %vm1164, %v1165, %v1163
        %v1167 = vsub.f32 0.0, %v1166
        %v1168 = vmul.f32 %v1167, 1.442695
        %v1169 = vpow.pop %v1168
        %v1170 = vsel %vm327, %v1166, -inf
        %v1171 = vrot.slane %v1170, 4
        %v1172 = vmax.f32 %v1170, %v1171
        %v1173 = vrot.slane %v1172, 2
        %v1174 = vmax.f32 %v1172, %v1173
        %v1175 = vrot.slane %v1174, 1
        %v1176 = vmax.f32 %v1174, %v1175
        %v1177 = vmul.f32 %v1176, %v1176
        %v1178 = vmul.f32 %v1176, %v1177
        %v1179 = vsel %vm327, %v995, 0.0
        %v1180 = vrot.slane %v1179, 4
        %v1181 = vadd.f32 %v1179, %v1180
        %v1182 = vrot.slane %v1181, 2
        %v1183 = vadd.f32 %v1181, %v1182
        %v1184 = vrot.slane %v1183, 1
        %v1185 = vadd.f32 %v1183, %v1184
        %v1186 = vmul.f32 %v1185, 0.125
        %v1187 = vsub.f32 %v312, %v1186
        %v1188 = vsel %vm327, %v1017, 0.0
        %v1189 = vrot.slane %v1188, 4
        %v1190 = vadd.f32 %v1188, %v1189
        %v1191 = vrot.slane %v1190, 2
        %v1192 = vadd.f32 %v1190, %v1191
        %v1193 = vrot.slane %v1192, 1
        %v1194 = vadd.f32 %v1192, %v1193
        %v1195 = vmul.f32 %v1194, 0.125
        %v1196 = vsub.f32 %v312, %v1195
        %v1197 = vsel %vm327, %v1038, 0.0
        %v1198 = vrot.slane %v1197, 4
        %v1199 = vadd.f32 %v1197, %v1198
        %v1200 = vrot.slane %v1199, 2
        %v1201 = vadd.f32 %v1199, %v1200
        %v1202 = vrot.slane %v1201, 1
        %v1203 = vadd.f32 %v1201, %v1202
        %v1204 = vmul.f32 %v1203, 0.125
        %v1205 = vsub.f32 %v312, %v1204
        %vm1206 = vcmp.eq.f32.partialorder %v1187, 0.0
        %v1207 = vsel %vm1206, 1.0, %v1187
        %v1209 = vrot.slane %v1207, 7
        %v1211 = vrcp.pop %v1209
        %v1212 = vmul.f32 %v1196, %v1211
        %v1213 = vand.u32 2147483647, %v1212
        %vm1214 = vcmp.gt.f32.partialorder %v1213, 2.4142137
        %vm1215 = vcmp.gt.f32.partialorder %v1213, 0.41421357
        %vm1216 = vmxor %vm1214, 1
        %vm1217 = vmand %vm1215, %vm1216
        %vm1218 = vcmp.eq.f32.partialorder %v1213, 0.0
        %v1219 = vsel %vm1218, 1.0, %v1213
        %v1220 = vrcp.pop %v1219
        %v1221 = vmul.f32 -1.0, %v1220
        %v1222 = vsub.f32 %v1213, 1.0
        %v1223 = vadd.f32 %v1213, 1.0
        %v1224 = vrcp.pop %v1223
        %v1225 = vmul.f32 %v1222, %v1224
        %v1226 = vsel %vm1217, %v1225, %v1213
        %v1227 = vsel %vm1214, %v1221, %v1226
        %v1228 = vsel %vm1217, 0.7853982, 0.0
        %v1229 = vsel %vm1214, 1.5707964, %v1228
        %v1230 = vmul.f32 %v1227, %v1227
        %v1231 = vmul.f32 %v1230, 0.080537446
        %v1232 = vsub.f32 %v1231, 0.13877685
        %v1233 = vmul.f32 %v1232, %v1230
        %v1234 = vadd.f32 %v1233, 0.19977711
        %v1235 = vmul.f32 %v1234, %v1230
        %v1236 = vsub.f32 %v1235, 0.3333295
        %v1237 = vmul.f32 %v1236, %v1230
        %v1238 = vmul.f32 %v1237, %v1227
        %v1239 = vadd.f32 %v1229, %v1238
        %v1240 = vadd.f32 %v1239, %v1227
        %vm1241 = vcmp.lt.f32.partialorder %v1212, 0.0
        %v1242 = vsub.f32 0.0, %v1240
        %v1243 = vsel %vm1241, %v1242, %v1240
        %vm1244 = vcmp.ge.f32.partialorder %v1196, 0.0
        %v1245 = vadd.f32 %v1243, 3.1415927
        %v1246 = vsub.f32 %v1243, 3.1415927
        %v1247 = vsel %vm1244, %v1245, %v1246
        %vm1248 = vcmp.gt.f32.partialorder %v1196, 0.0
        %vm1249 = vcmp.lt.f32.partialorder %v1196, 0.0
        %v1250 = vsel %vm1249, -1.5707964, 0.0
        %v1251 = vsel %vm1248, 1.5707964, %v1250
        %vm1252 = vcmp.gt.f32.partialorder %v1187, 0.0
        %vm1253 = vcmp.lt.f32.partialorder %v1187, 0.0
        %v1255 = vrot.slane %v1247, 1
        %v1258 = vrot.slane %v1251, 1
        %v1260 = vsel %vm1253, %v1255, %v1258
        %v1262 = vrot.slane %v1243, 1
        %v1264 = vsel %vm1252, %v1262, %v1260
        %v1265 = vmul.f32 %v1187, %v1187
        %v1266 = vmul.f32 %v1196, %v1196
        %v1268 = vrot.slane %v1266, 1
        %v1270 = vadd.f32 %v1265, %v1268
        %v1271 = vrsqrt.pop %v1270
        %v1272 = vmul.f32 %v1270, %v1271
        %vm1273 = vcmp.eq.f32.partialorder %v1270, inf
        %v1274 = vsel %vm1273, %v1270, %v1272
        %vm1275 = vcmp.eq.f32.partialorder %v1270, 0.0
        %v1276 = vand.u32 %v1270, 2147483648
        %v1277 = vsel %vm1275, %v1276, %v1274
        %vm1278 = vcmp.eq.f32.partialorder %v1277, 0.0
        %v1279 = vsel %vm1278, 1.0, %v1277
        %v1281 = vrot.slane %v1279, 6
        %v1283 = vrcp.pop %v1281
        %v1284 = vmul.f32 %v1205, %v1283
        %v1285 = vand.u32 2147483647, %v1284
        %vm1286 = vcmp.gt.f32.partialorder %v1285, 2.4142137
        %vm1287 = vcmp.gt.f32.partialorder %v1285, 0.41421357
        %vm1288 = vmxor %vm1286, 1
        %vm1289 = vmand %vm1287, %vm1288
        %vm1290 = vcmp.eq.f32.partialorder %v1285, 0.0
        %v1291 = vsel %vm1290, 1.0, %v1285
        %v1292 = vrcp.pop %v1291
        %v1293 = vmul.f32 -1.0, %v1292
        %v1294 = vsub.f32 %v1285, 1.0
        %v1295 = vadd.f32 %v1285, 1.0
        %v1296 = vrcp.pop %v1295
        %v1297 = vmul.f32 %v1294, %v1296
        %v1298 = vsel %vm1289, %v1297, %v1285
        %v1299 = vsel %vm1286, %v1293, %v1298
        %v1300 = vsel %vm1289, 0.7853982, 0.0
        %v1301 = vsel %vm1286, 1.5707964, %v1300
        %v1302 = vmul.f32 %v1299, %v1299
        %v1303 = vmul.f32 %v1302, 0.080537446
        %v1304 = vsub.f32 %v1303, 0.13877685
        %v1305 = vmul.f32 %v1304, %v1302
        %v1306 = vadd.f32 %v1305, 0.19977711
        %v1307 = vmul.f32 %v1306, %v1302
        %v1308 = vsub.f32 %v1307, 0.3333295
        %v1309 = vmul.f32 %v1308, %v1302
        %v1310 = vmul.f32 %v1309, %v1299
        %v1311 = vadd.f32 %v1301, %v1310
        %v1312 = vadd.f32 %v1311, %v1299
        %vm1313 = vcmp.lt.f32.partialorder %v1284, 0.0
        %v1314 = vsub.f32 0.0, %v1312
        %v1315 = vsel %vm1313, %v1314, %v1312
        %vm1316 = vcmp.ge.f32.partialorder %v1205, 0.0
        %v1317 = vadd.f32 %v1315, 3.1415927
        %v1318 = vsub.f32 %v1315, 3.1415927
        %v1319 = vsel %vm1316, %v1317, %v1318
        %vm1320 = vcmp.gt.f32.partialorder %v1205, 0.0
        %vm1321 = vcmp.lt.f32.partialorder %v1205, 0.0
        %v1322 = vsel %vm1321, -1.5707964, 0.0
        %v1323 = vsel %vm1320, 1.5707964, %v1322
        %vm1324 = vcmp.gt.f32.partialorder %v1277, 0.0
        %vm1325 = vcmp.lt.f32.partialorder %v1277, 0.0
        %v1327 = vrot.slane %v1319, 2
        %v1330 = vrot.slane %v1323, 2
        %v1332 = vsel %vm1325, %v1327, %v1330
        %v1334 = vrot.slane %v1315, 2
        %v1336 = vsel %vm1324, %v1334, %v1332
        %v1337 = vlaneseq
        %v1338 = vshrl.u32 %v1337, 7
        %v1339 = vsub.s32 0, %v1338
        %v1340 = vrot.slane %v1264, %v1339
        %v1341 = vsub.f32 %v1103, %v1340
        %v1342 = vlaneseq
        %v1343 = vshrl.u32 %v1342, 7
        %v1344 = vsub.s32 0, %v1343
        %v1345 = vrot.slane %v1336, %v1344
        %v1346 = vsub.f32 %v1158, %v1345
        %v1347 = vmul.f32 %v311, %v311
        %v1349 = vrot.slane %v1347, 1
        %v1351 = vadd.f32 %v1347, %v1349
        %v1352 = vrot.slane %v1347, 2
        %v1354 = vadd.f32 %v1351, %v1352
        %v1355 = vrsqrt.pop %v1354
        %v1356 = vmul.f32 %v1354, %v1355
        %vm1357 = vcmp.eq.f32.partialorder %v1354, inf
        %v1358 = vsel %vm1357, %v1354, %v1356
        %vm1359 = vcmp.eq.f32.partialorder %v1354, 0.0
        %v1360 = vand.u32 %v1354, 2147483648
        %v1361 = vsel %vm1359, %v1360, %v1358
        %vm1362 = vcmask 122880
        %v1363 = vsel %vm1362, %v1361, -inf
        %1364 = vmax.xlane.f32.xlu0 %v1363
        %v1365 = vpop.xlane.xlu0 %1364
        %v1366 = vmul.f32 %v1365, %v1365
        %v1367 = vmul.f32 %v1365, %v1366
        %v1368 = vrcp.pop %v1367
        %v1369 = vmul.f32 %v1178, %v1368
        %1370 = vst.msk [vmem:[%s279] sm:$0xff] %vm327, %v1341
        %s1371 = scalar_lea.vmem %s279, 8 [#allocation2]
        %1372 = vst.msk [vmem:[%s1371] sm:$0xff] %vm327, %v1346
        %s1373 = scalar_lea.vmem %s279, 16 [#allocation2]
        %1374 = vst.msk [vmem:[%s1373] sm:$0xff] %vm327, %v1166
        %s1375 = scalar_lea.vmem %s279, 24 [#allocation2]
        %1376 = vst.msk [vmem:[%s1375] sm:$0xff] %vm327, %v1042
        %s1377 = scalar_lea.vmem %s279, 32 [#allocation2]
        %1378 = vst.msk [vmem:[%s1377] sm:$0xff] %vm327, %v1047
        %s1379 = scalar_lea.vmem %s279, 40 [#allocation2]
        %1380 = vst.msk [vmem:[%s1379] sm:$0xff] %vm327, %v1052
        %s1381 = scalar_lea.vmem %s279, 48 [#allocation2]
        %1382 = vst.msk [vmem:[%s1381] sm:$0xff] %vm327, %v995
        %s1383 = scalar_lea.vmem %s279, 56 [#allocation2]
        %1384 = vst.msk [vmem:[%s1383] sm:$0xff] %vm327, %v1017
        %s1385 = scalar_lea.vmem %s279, 64 [#allocation2]
        %1386 = vst.msk [vmem:[%s1385] sm:$0xff] %vm327, %v1038
        %1387 = vst.msk [vmem:[%s286] sm:$0xff] %vm327, %v1169
        %1388 = vst.msk [vmem:[%s292] sm:$0x1] %vm1362, %v1369
        %s1389 = sand.u32 %s127, 1
        %s1390 = scalar_lea.sflag [#allocation3], %s1389
        %s1391 = sand.u32 %s127, 1
        %s1392 = smul.addr %s1391, 72
        %s1393 = scalar_lea.vmem [#allocation2], %s1392
        %s1394 = sand.u32 %s23, 1
        %s1395 = scalar_lea.sflag [#allocation5], %s1394
        %s1396 = sand.u32 %s155, 1
        %s1397 = smul.addr %s1396, 8
        %s1398 = scalar_lea.vmem [#allocation4], %s1397
        %s1399 = sand.u32 %s23, 1
        %s1400 = scalar_lea.sflag [#allocation5], %s1399
        %s1401 = sand.u32 %s183, 1
        %s1402 = scalar_lea.vmem [#allocation6], %s1401
        // Predicated region
        $region33: #{tpu_custom_call.1} parent=31 // pred_check
          %p1403 = pneg %p137
        $region34: #{tpu_custom_call.1} parent=31 // pred_check_branch
          %1405 = sbr.rel (%p1403) target = $region36
        $region35: #{tpu_custom_call.1} parent=31 // pred_region
          %s1407 = ssub.s32 1152, 1152
          %1408 = vsyncadd %s1390, %s1407
          %s1409 = smul.addr %s27, 9
          %s1410 = sadd.s32 %s28, %s1409
          %s1411 = smul.addr %s1410, 128
          %s1412 = scalar_lea.hbm %s3, %s1411
          %s1413 = sshll.u32 %s1393, 4
          %s1414 = int_to_ptr.vmem [resolvable:$true] %s1413
          %1419 = dma.vmem_to_hbm [thread:$0]  %s1414, 1152, %s1412, %s1390, 128, 128, 8
        $region36: #{tpu_custom_call.1} parent=31 // pred_fallthru
          _
        // Predicated region
        $region37: #{tpu_custom_call.1} parent=31 // pred_check
          %p1420 = pneg %p165
        $region38: #{tpu_custom_call.1} parent=31 // pred_check_branch
          %1422 = sbr.rel (%p1420) target = $region40
        $region39: #{tpu_custom_call.1} parent=31 // pred_region
          %s1424 = ssub.s32 128, 128
          %1425 = vsyncadd %s1395, %s1424
          %s1426 = sadd.s32 %s28, %s27
          %s1427 = smul.addr %s1426, 128
          %s1428 = scalar_lea.hbm %s4, %s1427
          %s1430 = sshll.u32 %s1398, 4
          %s1431 = int_to_ptr.vmem [resolvable:$true] %s1430
          %1433 = dma.vmem_to_hbm [thread:$0]  %s1431, 128, %s1428, %s1395
        $region40: #{tpu_custom_call.1} parent=31 // pred_fallthru
          _
        // Predicated region
        $region41: #{tpu_custom_call.1} parent=31 // pred_check
          %p1434 = pneg %p193
        $region42: #{tpu_custom_call.1} parent=31 // pred_check_branch
          %1436 = sbr.rel (%p1434) target = $region44
        $region43: #{tpu_custom_call.1} parent=31 // pred_region
          %s1438 = ssub.s32 16, 16
          %1439 = vsyncadd %s1400, %s1438
          %s1440 = sadd.s32 %s28, %s27
          %s1441 = smul.addr %s1440, 16
          %s1442 = scalar_lea.hbm %s5, %s1441
          %s1444 = sshll.u32 %s1402, 4
          %s1445 = int_to_ptr.vmem [resolvable:$true] %s1444
          %1447 = dma.vmem_to_hbm [thread:$0]  %s1445, 16, %s1442, %s1400
        $region44: #{tpu_custom_call.1} parent=31 // pred_fallthru
          _
      $region32: #{tpu_custom_call.1} parent=5 // pred_fallthru
        _
      %p1448 = scmp.le.s32.totalorder 2, %s18
      // Predicated region
      $region45: #{tpu_custom_call.1} parent=5 // pred_check
        %p1449 = pneg %p1448
      $region46: #{tpu_custom_call.1} parent=5 // pred_check_branch
        %1451 = sbr.rel (%p1449) target = $region48
      $region47: #{tpu_custom_call.1} parent=5 // pred_region
        %s1452 = ssub.s32 %s18, 2
        // Predicated region
        $region49: #{tpu_custom_call.1} parent=47 // pred_check
          %p1453 = pneg %p143
        $region50: #{tpu_custom_call.1} parent=47 // pred_check_branch
          %1455 = sbr.rel (%p1453) target = $region52
        $region51: #{tpu_custom_call.1} parent=47 // pred_region
          %s1456 = sand.u32 %s128, 1
          %s1457 = scalar_lea.sflag [#allocation3], %s1456
          %s1458 = sand.u32 %s128, 1
          %s1459 = smul.addr %s1458, 72
          %s1460 = scalar_lea.vmem [#allocation2], %s1459
          %1461 = dma.done %s1457, 1152
        $region52: #{tpu_custom_call.1} parent=47 // pred_fallthru
          _
        // Predicated region
        $region53: #{tpu_custom_call.1} parent=47 // pred_check
          %p1462 = pneg %p171
        $region54: #{tpu_custom_call.1} parent=47 // pred_check_branch
          %1464 = sbr.rel (%p1462) target = $region56
        $region55: #{tpu_custom_call.1} parent=47 // pred_region
          %s1465 = sand.u32 %s24, 1
          %s1466 = scalar_lea.sflag [#allocation5], %s1465
          %s1467 = sand.u32 %s156, 1
          %s1468 = smul.addr %s1467, 8
          %s1469 = scalar_lea.vmem [#allocation4], %s1468
          %1470 = dma.done %s1466, 128
        $region56: #{tpu_custom_call.1} parent=47 // pred_fallthru
          _
        // Predicated region
        $region57: #{tpu_custom_call.1} parent=47 // pred_check
          %p1471 = pneg %p199
        $region58: #{tpu_custom_call.1} parent=47 // pred_check_branch
          %1473 = sbr.rel (%p1471) target = $region60
        $region59: #{tpu_custom_call.1} parent=47 // pred_region
          %s1474 = sand.u32 %s24, 1
          %s1475 = scalar_lea.sflag [#allocation5], %s1474
          %s1476 = sand.u32 %s184, 1
          %s1477 = scalar_lea.vmem [#allocation6], %s1476
          %1478 = dma.done %s1475, 16
        $region60: #{tpu_custom_call.1} parent=47 // pred_fallthru
          _
      $region48: #{tpu_custom_call.1} parent=5 // pred_fallthru
        _
    $region6: #{tpu_custom_call.1} parent=1 // loop_footer
      %s22 = sadd.s32 1, %s18
    $region7: #{tpu_custom_call.1} parent=1 // loop_footer_branch
      %17 = sbr.rel target = $region3
    $region8: #{tpu_custom_call.1} parent=1 // loop_exit
      _
    %1479 = vsyncpa [#allocation3], 1
    %s1480 = scalar_lea.sflag [#allocation3], 1
    %1481 = vsyncpa %s1480, 1
    %1482 = vsyncpa [#allocation5], 1
    %s1483 = scalar_lea.sflag [#allocation5], 1
    %1484 = vsyncpa %s1483, 1

</llo_original>
